<compile_context>
chip_gen: v6e
topology: v6e:2x2x1
jax: 0.10.0
libtpu: 0.0.40
codegen_flags: <defaults>
</compile_context>

<pallas_src>
import functools
import math

import jax
import jax.numpy as jnp
from jax.experimental import pallas as pl
from jax.experimental.pallas import tpu as pltpu

MATMUL_DTYPE = jnp.bfloat16            # MXU operand dtype; accumulation is f32
VMEM_LIMIT_BYTES = 32 * 1024 * 1024    # safe scoped-VMEM limit on v5e/v6e/v7x


def _compiler_params(dimension_semantics):
    return pltpu.CompilerParams(dimension_semantics=dimension_semantics,
                                vmem_limit_bytes=VMEM_LIMIT_BYTES)


def _block(dim, max_tile, align):
    """Largest legal block edge <= max_tile (full dim is always legal)."""
    if dim <= max_tile:
        return dim
    return max((max_tile // align) * align, align)


# ----------------------------- Pallas kernels -----------------------------

def _linear_kernel(x_ref, w_ref, b_ref, o_ref):
    x = x_ref[...].astype(w_ref.dtype)
    acc = jnp.dot(x, w_ref[...], preferred_element_type=jnp.float32)
    o_ref[...] = acc + b_ref[...]


def _ffn_kernel(x_ref, w1_ref, b1_ref, w2_ref, b2_ref, o_ref):
    x = x_ref[...].astype(w1_ref.dtype)
    h = jnp.dot(x, w1_ref[...], preferred_element_type=jnp.float32) + b1_ref[...]
    h = jnp.maximum(h, 0.0)                                   # ReLU in f32
    o_ref[...] = jnp.dot(h.astype(w2_ref.dtype), w2_ref[...],
                         preferred_element_type=jnp.float32) + b2_ref[...]


def _add_ln_kernel(x_ref, r_ref, g_ref, b_ref, o_ref):
    x = x_ref[...] + r_ref[...]                               # fused residual add
    mu = jnp.mean(x, axis=-1, keepdims=True)
    var = jnp.mean(jnp.square(x - mu), axis=-1, keepdims=True)
    o_ref[...] = (x - mu) * jax.lax.rsqrt(var + 1e-5) * g_ref[...] + b_ref[...]


def _mha_kernel(q_ref, k_ref, v_ref, m_ref, o_ref, *, scale):
    # q_ref: (H, Sq, dh)   k_ref / v_ref: (H, Sk, dh)   m_ref: (mq, Sk)
    Sq = q_ref.shape[1]
    Sk = k_ref.shape[1]
    q = q_ref[...].astype(MATMUL_DTYPE)
    k = k_ref[...].astype(MATMUL_DTYPE)
    v = v_ref[...].astype(MATMUL_DTYPE)
    # scores: contract head_dim, batch over heads -> (H, Sq, Sk) in f32
    s = jnp.einsum("hqd,hkd->hqk", q, k,
                   preferred_element_type=jnp.float32) * scale
    mask = jnp.broadcast_to(m_ref[...], (Sq, Sk))             # in-kernel broadcast
    s = jnp.where((mask == 0.0)[None, :, :], -1e9, s)
    # softmax in f32 (EUP reciprocal keeps the epilogue off the VPU)
    s = s - jnp.max(s, axis=-1, keepdims=True)
    p = jnp.exp(s)
    p = p * pl.reciprocal(jnp.sum(p, axis=-1, keepdims=True), approx=True)
    o_ref[...] = jnp.einsum("hqk,hkd->hqd", p.astype(MATMUL_DTYPE), v,
                            preferred_element_type=jnp.float32)


# ----------------------------- Pallas wrappers -----------------------------

def pallas_linear(x2d, w, b, *, tm=256, tn=512):
    M, K = x2d.shape
    N = w.shape[1]
    bm = _block(M, tm, 8)
    bn = _block(N, tn, 128)
    grid = (pl.cdiv(M, bm), pl.cdiv(N, bn))
    return pl.pallas_call(
        _linear_kernel,
        out_shape=jax.ShapeDtypeStruct((M, N), jnp.float32),
        grid=grid,
        in_specs=[pl.BlockSpec((bm, K), lambda i, j: (i, 0)),   # resident across j
                  pl.BlockSpec((K, bn), lambda i, j: (0, j)),
                  pl.BlockSpec((1, bn), lambda i, j: (0, j))],
        out_specs=pl.BlockSpec((bm, bn), lambda i, j: (i, j)),
        compiler_params=_compiler_params(("parallel", "parallel")),
    )(x2d, w, b.reshape(1, N))


def pallas_ffn(x, p, *, tm=256):
    B, S, D = x.shape
    Dff = p["w1"].shape[1]
    M = B * S
    bm = _block(M, tm, 8)
    # TODO(synk): for large D/Dff, tile Dff and stream weight tiles so bf16 W1+W2
    # residence stays comfortably under v7x's 64 MiB VMEM.
    out = pl.pallas_call(
        _ffn_kernel,
        out_shape=jax.ShapeDtypeStruct((M, D), jnp.float32),
        grid=(pl.cdiv(M, bm),),
        in_specs=[pl.BlockSpec((bm, D), lambda i: (i, 0)),
                  pl.BlockSpec((D, Dff), lambda i: (0, 0)),
                  pl.BlockSpec((1, Dff), lambda i: (0, 0)),
                  pl.BlockSpec((Dff, D), lambda i: (0, 0)),
                  pl.BlockSpec((1, D), lambda i: (0, 0))],
        out_specs=pl.BlockSpec((bm, D), lambda i: (i, 0)),
        compiler_params=_compiler_params(("parallel",)),
    )(x.reshape(M, D), p["w1"], p["b1"].reshape(1, Dff),
      p["w2"], p["b2"].reshape(1, D))
    return out.reshape(B, S, D)


def pallas_add_layernorm(x, res, gamma, beta, *, tm=512):
    B, S, D = x.shape
    M = B * S
    bm = _block(M, tm, 8)
    out = pl.pallas_call(
        _add_ln_kernel,
        out_shape=jax.ShapeDtypeStruct((M, D), jnp.float32),
        grid=(pl.cdiv(M, bm),),
        in_specs=[pl.BlockSpec((bm, D), lambda i: (i, 0)),
                  pl.BlockSpec((bm, D), lambda i: (i, 0)),
                  pl.BlockSpec((1, D), lambda i: (0, 0)),
                  pl.BlockSpec((1, D), lambda i: (0, 0))],
        out_specs=pl.BlockSpec((bm, D), lambda i: (i, 0)),
        compiler_params=_compiler_params(("parallel",)),
    )(x.reshape(M, D), res.reshape(M, D),
      gamma.reshape(1, D), beta.reshape(1, D))
    return out.reshape(B, S, D)


def pallas_attention(q, k, v, mask, scale):
    # q: (B, H, Sq, dh)   k/v: (B, H, Sk, dh)   mask: (B, mq, Sk), mq in {1, Sq}
    B, H, Sq, dh = q.shape
    Sk = k.shape[2]
    mq = mask.shape[1]
    kern = functools.partial(_mha_kernel, scale=scale)
    # TODO(synk): add an Sk grid axis with online-softmax (flash-style) running
    # max/sum scratch for long sequences instead of the full (Sq, Sk) score tile.
    return pl.pallas_call(
        kern,
        out_shape=jax.ShapeDtypeStruct((B, H, Sq, dh), jnp.float32),
        grid=(B,),
        in_specs=[pl.BlockSpec((None, H, Sq, dh), lambda b: (b, 0, 0, 0)),
                  pl.BlockSpec((None, H, Sk, dh), lambda b: (b, 0, 0, 0)),
                  pl.BlockSpec((None, H, Sk, dh), lambda b: (b, 0, 0, 0)),
                  pl.BlockSpec((None, mq, Sk), lambda b: (b, 0, 0))],
        out_specs=pl.BlockSpec((None, H, Sq, dh), lambda b: (b, 0, 0, 0)),
        compiler_params=_compiler_params(("parallel",)),
    )(q, k, v, mask)


# ----------------------------- model pieces -----------------------------

def positional_encoding(seq_len, d):
    pos = jnp.arange(seq_len, dtype=jnp.float32)[:, None]
    i = jnp.arange(d, dtype=jnp.float32)[None, :]
    angle = pos / jnp.power(10000.0, (2.0 * jnp.floor(i / 2.0)) / d)
    pe = jnp.where(jnp.mod(jnp.arange(d), 2) == 0,
                   jnp.sin(angle), jnp.cos(angle))
    return pe.astype(jnp.float32)


def multi_head_attention(x_q, x_kv, mask, p, num_heads):
    B, Sq, D = x_q.shape
    Sk = x_kv.shape[1]
    dh = D // num_heads
    xq2 = x_q.reshape(B * Sq, D)
    if x_q is x_kv:
        # fused QKV projection: x is read once, one (D, 3D) matmul
        qkv = pallas_linear(xq2, p["wqkv"], p["bqkv"])          # (B*Sq, 3D)
        q, k, v = qkv[:, :D], qkv[:, D:2 * D], qkv[:, 2 * D:]
    else:
        # cross-attention: Q from decoder stream, fused KV from encoder output
        xkv2 = x_kv.reshape(B * Sk, D)
        q = pallas_linear(xq2, p["wqkv"][:, :D], p["bqkv"][:D])
        kv = pallas_linear(xkv2, p["wqkv"][:, D:], p["bqkv"][D:])
        k, v = kv[:, :D], kv[:, D:]
    q = q.reshape(B, Sq, num_heads, dh).transpose(0, 2, 1, 3)
    k = k.reshape(B, Sk, num_heads, dh).transpose(0, 2, 1, 3)
    v = v.reshape(B, Sk, num_heads, dh).transpose(0, 2, 1, 3)
    mask = mask.astype(jnp.float32)                             # (B, mq, Sk)
    attn = pallas_attention(q, k, v, mask, 1.0 / math.sqrt(dh))  # (B, H, Sq, dh)
    attn = attn.transpose(0, 2, 1, 3).reshape(B * Sq, D)
    return pallas_linear(attn, p["wo"], p["bo"]).reshape(B, Sq, D)


def encoder_forward(src, src_mask, ep, num_heads):
    D = ep["embed"].shape[1]
    x = jnp.take(ep["embed"], src, axis=0) * math.sqrt(D)
    x = x + positional_encoding(src.shape[1], D)[None]
    for lp in ep["layers"]:
        a = multi_head_attention(x, x, src_mask, lp["attn"], num_heads)
        x = pallas_add_layernorm(x, a, lp["ln1_g"], lp["ln1_b"])
        f = pallas_ffn(x, lp["ffn"])
        x = pallas_add_layernorm(x, f, lp["ln2_g"], lp["ln2_b"])
    return x


def decoder_forward(tar, enc_out, src_mask, tar_mask, dp, num_heads):
    D = dp["embed"].shape[1]
    x = jnp.take(dp["embed"], tar, axis=0) * math.sqrt(D)
    x = x + positional_encoding(tar.shape[1], D)[None]
    for lp in dp["layers"]:
        a = multi_head_attention(x, x, tar_mask, lp["self_attn"], num_heads)
        x = pallas_add_layernorm(x, a, lp["ln1_g"], lp["ln1_b"])
        c = multi_head_attention(x, enc_out, src_mask, lp["cross_attn"], num_heads)
        x = pallas_add_layernorm(x, c, lp["ln2_g"], lp["ln2_b"])
        f = pallas_ffn(x, lp["ffn"])
        x = pallas_add_layernorm(x, f, lp["ln3_g"], lp["ln3_b"])
    return x


def transformer_forward(src, tar, src_mask, tar_mask, params, num_heads):
    e_out = encoder_forward(src, src_mask, params["encoder"], num_heads)
    d_out = decoder_forward(tar, e_out, src_mask, tar_mask,
                            params["decoder"], num_heads)
    B, S, D = d_out.shape
    logits = pallas_linear(d_out.reshape(B * S, D),
                           params["out_w"], params["out_b"])
    return logits.reshape(B, S, params["out_w"].shape[1])


# ----------------------------- parameter init -----------------------------

def _dense(key, fan_in, fan_out):
    kw, kb = jax.random.split(key)
    bound = 1.0 / math.sqrt(fan_in)
    w = jax.random.uniform(kw, (fan_in, fan_out), jnp.float32, -bound, bound)
    b = jax.random.uniform(kb, (fan_out,), jnp.float32, -bound, bound)
    return w, b


def _attn_params(key, d):
    kq, kk, kv, ko = jax.random.split(key, 4)
    wq, bq = _dense(kq, d, d)
    wk, bk = _dense(kk, d, d)
    wv, bv = _dense(kv, d, d)
    wo, bo = _dense(ko, d, d)
    return {"wqkv": jnp.concatenate([wq, wk, wv], axis=1).astype(MATMUL_DTYPE),
            "bqkv": jnp.concatenate([bq, bk, bv]),
            "wo": wo.astype(MATMUL_DTYPE), "bo": bo}


def _ffn_params(key, d, dff):
    k1, k2 = jax.random.split(key)
    w1, b1 = _dense(k1, d, dff)
    w2, b2 = _dense(k2, dff, d)
    return {"w1": w1.astype(MATMUL_DTYPE), "b1": b1,
            "w2": w2.astype(MATMUL_DTYPE), "b2": b2}


def _ln_params(d):
    return jnp.ones((d,), jnp.float32), jnp.zeros((d,), jnp.float32)


def init_params(key, src_vocab, tar_vocab, d, num_layers, num_heads):
    dff = 4 * d
    ke, kd, ko, kee, kde = jax.random.split(key, 5)
    enc = {"embed": 0.02 * jax.random.normal(kee, (src_vocab, d), jnp.float32),
           "layers": []}
    for k in jax.random.split(ke, num_layers):
        ka, kf = jax.random.split(k)
        g1, b1 = _ln_params(d)
        g2, b2 = _ln_params(d)
        enc["layers"].append({"attn": _attn_params(ka, d),
                              "ffn": _ffn_params(kf, d, dff),
                              "ln1_g": g1, "ln1_b": b1,
                              "ln2_g": g2, "ln2_b": b2})
    dec = {"embed": 0.02 * jax.random.normal(kde, (tar_vocab, d), jnp.float32),
           "layers": []}
    for k in jax.random.split(kd, num_layers):
        ks, kc, kf = jax.random.split(k, 3)
        g1, b1 = _ln_params(d)
        g2, b2 = _ln_params(d)
        g3, b3 = _ln_params(d)
        dec["layers"].append({"self_attn": _attn_params(ks, d),
                              "cross_attn": _attn_params(kc, d),
                              "ffn": _ffn_params(kf, d, dff),
                              "ln1_g": g1, "ln1_b": b1,
                              "ln2_g": g2, "ln2_b": b2,
                              "ln3_g": g3, "ln3_b": b3})
    out_w, out_b = _dense(ko, d, tar_vocab)
    return {"encoder": enc, "decoder": dec,
            "out_w": out_w.astype(MATMUL_DTYPE), "out_b": out_b}


# ----------------------------- main -----------------------------

if __name__ == "__main__":
    B, S_SRC, S_TAR = 2, 8, 8
    SRC_VOCAB, TAR_VOCAB = 16, 16
    EMBED_DIM, NUM_LAYERS, NUM_HEADS = 32, 2, 4

    root = jax.random.PRNGKey(0)
    kp, ks, kt = jax.random.split(root, 3)
    params = init_params(kp, SRC_VOCAB, TAR_VOCAB, EMBED_DIM,
                         NUM_LAYERS, NUM_HEADS)

    src = jax.random.randint(ks, (B, S_SRC), 0, SRC_VOCAB)
    tar = jax.random.randint(kt, (B, S_TAR), 0, TAR_VOCAB)
    src_mask = jnp.ones((B, 1, S_SRC), jnp.float32)               # no padding
    tar_mask = jnp.broadcast_to(
        jnp.tril(jnp.ones((S_TAR, S_TAR), jnp.float32))[None],
        (B, S_TAR, S_TAR))                                        # causal

    fwd = jax.jit(functools.partial(transformer_forward, num_heads=NUM_HEADS))
    out = fwd(src, tar, src_mask, tar_mask, params)
    out = jax.block_until_ready(out)
    assert out.shape == (B, S_TAR, TAR_VOCAB), out.shape
    assert jnp.all(jnp.isfinite(out))
    print("KERNEL_OK")
</pallas_src>

<mosaic_0001>
module attributes {stable_mosaic.version = 11 : i64} {
  func.func @_linear_kernel(%arg0: i32, %arg1: i32, %arg2: memref<16x32xf32, #tpu.memory_space<vmem>>, %arg3: memref<32x96xbf16, #tpu.memory_space<vmem>>, %arg4: memref<1x96xf32, #tpu.memory_space<vmem>>, %arg5: memref<16x96xf32, #tpu.memory_space<vmem>>) attributes {dimension_semantics = [#tpu.dimension_semantics<parallel>, #tpu.dimension_semantics<parallel>], iteration_bounds = array<i64: 1, 1>, scalar_prefetch = 0 : i64, scratch_operands = 0 : i64, tpu.core_type = #tpu.core_type<tc>, window_params = [{transform_indices = @transform_0, window_bounds = array<i64: 16, 32>}, {transform_indices = @transform_1, window_bounds = array<i64: 32, 96>}, {transform_indices = @transform_2, window_bounds = array<i64: 1, 96>}, {transform_indices = @transform_3, window_bounds = array<i64: 16, 96>}]} {
    %c0 = arith.constant 0 : index
    %c0_0 = arith.constant 0 : index
    %0 = vector.load %arg2[%c0, %c0_0] : memref<16x32xf32, #tpu.memory_space<vmem>>, vector<16x32xf32>
    %1 = arith.truncf %0 : vector<16x32xf32> to vector<16x32xbf16>
    %c0_1 = arith.constant 0 : index
    %c0_2 = arith.constant 0 : index
    %2 = vector.load %arg3[%c0_1, %c0_2] : memref<32x96xbf16, #tpu.memory_space<vmem>>, vector<32x96xbf16>
    %cst = arith.constant dense<0.000000e+00> : vector<16x96xf32>
    %3 = tpu.matmul %1, %2, %cst {dimension_numbers = #tpu.dot_dimension_numbers<[1], [0], [0], [1], [0, 0, 1, 1], [], []>} : vector<16x32xbf16>, vector<32x96xbf16>, vector<16x96xf32> -> vector<16x96xf32>
    %c0_3 = arith.constant 0 : index
    %c0_4 = arith.constant 0 : index
    %4 = vector.load %arg4[%c0_3, %c0_4] : memref<1x96xf32, #tpu.memory_space<vmem>>, vector<1x96xf32>
    %5 = vector.broadcast %4 : vector<1x96xf32> to vector<16x96xf32>
    %6 = arith.addf %3, %5 : vector<16x96xf32>
    %c0_5 = arith.constant 0 : index
    %c0_6 = arith.constant 0 : index
    %7 = vector.load %arg5[%c0_5, %c0_6] : memref<16x96xf32, #tpu.memory_space<vmem>>, vector<16x96xf32>
    tpu.vector_store %arg5[%c0_5, %c0_6], %6 {strides = array<i32>} : memref<16x96xf32, #tpu.memory_space<vmem>>, vector<16x96xf32>,
    return
  }
  func.func @transform_0(%arg0: i32, %arg1: i32) -> (i32, i32) {
    %c0_i32 = arith.constant 0 : i32
    %c0_i32_0 = arith.constant 0 : i32
    return %arg0, %c0_i32 : i32, i32
  }
  func.func @transform_1(%arg0: i32, %arg1: i32) -> (i32, i32) {
    %c0_i32 = arith.constant 0 : i32
    %c0_i32_0 = arith.constant 0 : i32
    return %c0_i32, %arg1 : i32, i32
  }
  func.func @transform_2(%arg0: i32, %arg1: i32) -> (i32, i32) {
    %c0_i32 = arith.constant 0 : i32
    %c0_i32_0 = arith.constant 0 : i32
    return %c0_i32, %arg1 : i32, i32
  }
  func.func @transform_3(%arg0: i32, %arg1: i32) -> (i32, i32) {
    %c0_i32 = arith.constant 0 : i32
    return %arg0, %arg1 : i32, i32
  }
}

module attributes {stable_mosaic.version = 11 : i64} {
  func.func @_mha_kernel(%arg0: i32, %arg1: memref<1x4x8x8xf32, #tpu.memory_space<vmem>>, %arg2: memref<1x4x8x8xf32, #tpu.memory_space<vmem>>, %arg3: memref<1x4x8x8xf32, #tpu.memory_space<vmem>>, %arg4: memref<1x8x8xf32, #tpu.memory_space<vmem>>, %arg5: memref<1x4x8x8xf32, #tpu.memory_space<vmem>>) attributes {dimension_semantics = [#tpu.dimension_semantics<parallel>], iteration_bounds = array<i64: 2>, scalar_prefetch = 0 : i64, scratch_operands = 0 : i64, tpu.core_type = #tpu.core_type<tc>, window_params = [{transform_indices = @transform_0, window_bounds = array<i64: 1, 4, 8, 8>}, {transform_indices = @transform_1, window_bounds = array<i64: 1, 4, 8, 8>}, {transform_indices = @transform_2, window_bounds = array<i64: 1, 4, 8, 8>}, {transform_indices = @transform_3, window_bounds = array<i64: 1, 8, 8>}, {transform_indices = @transform_4, window_bounds = array<i64: 1, 4, 8, 8>}]} {
    %c0 = arith.constant 0 : index
    %c0_0 = arith.constant 0 : index
    %c0_1 = arith.constant 0 : index
    %c0_2 = arith.constant 0 : index
    %0 = vector.load %arg1[%c0, %c0_0, %c0_1, %c0_2] : memref<1x4x8x8xf32, #tpu.memory_space<vmem>>, vector<1x4x8x8xf32>
    %1 = vector.shape_cast %0 : vector<1x4x8x8xf32> to vector<4x8x8xf32>
    %2 = arith.truncf %1 : vector<4x8x8xf32> to vector<4x8x8xbf16>
    %c0_3 = arith.constant 0 : index
    %c0_4 = arith.constant 0 : index
    %c0_5 = arith.constant 0 : index
    %c0_6 = arith.constant 0 : index
    %3 = vector.load %arg2[%c0_3, %c0_4, %c0_5, %c0_6] : memref<1x4x8x8xf32, #tpu.memory_space<vmem>>, vector<1x4x8x8xf32>
    %4 = vector.shape_cast %3 : vector<1x4x8x8xf32> to vector<4x8x8xf32>
    %5 = arith.truncf %4 : vector<4x8x8xf32> to vector<4x8x8xbf16>
    %c0_7 = arith.constant 0 : index
    %c0_8 = arith.constant 0 : index
    %c0_9 = arith.constant 0 : index
    %c0_10 = arith.constant 0 : index
    %6 = vector.load %arg3[%c0_7, %c0_8, %c0_9, %c0_10] : memref<1x4x8x8xf32, #tpu.memory_space<vmem>>, vector<1x4x8x8xf32>
    %7 = vector.shape_cast %6 : vector<1x4x8x8xf32> to vector<4x8x8xf32>
    %8 = arith.truncf %7 : vector<4x8x8xf32> to vector<4x8x8xbf16>
    "tpu.trace_start"() <{level = 10 : i32, message = "hqd,hkd->hqk"}> : () -> ()
    %cst = arith.constant dense<0.000000e+00> : vector<4x8x8xf32>
    %9 = tpu.matmul %2, %5, %cst {dimension_numbers = #tpu.dot_dimension_numbers<[2], [2], [1], [1], [0, 0, 0, 1, 1, 1], [0], [0]>} : vector<4x8x8xbf16>, vector<4x8x8xbf16>, vector<4x8x8xf32> -> vector<4x8x8xf32>
    "tpu.trace_stop"() : () -> ()
    %cst_11 = arith.constant 0.353553385 : f32
    %10 = vector.broadcast %cst_11 : f32 to vector<4x8x8xf32>
    %11 = arith.mulf %9, %10 : vector<4x8x8xf32>
    %c0_12 = arith.constant 0 : index
    %c0_13 = arith.constant 0 : index
    %c0_14 = arith.constant 0 : index
    %12 = vector.load %arg4[%c0_12, %c0_13, %c0_14] : memref<1x8x8xf32, #tpu.memory_space<vmem>>, vector<1x8x8xf32>
    %13 = vector.shape_cast %12 : vector<1x8x8xf32> to vector<8x8xf32>
    %cst_15 = arith.constant 0.000000e+00 : f32
    %14 = vector.broadcast %cst_15 : f32 to vector<8x8xf32>
    %15 = arith.cmpf oeq, %13, %14 : vector<8x8xf32>
    %16 = vector.shape_cast %15 : vector<8x8xi1> to vector<1x8x8xi1>
    %cst_16 = arith.constant -1.000000e+09 : f32
    %17 = vector.shape_cast %16 : vector<1x8x8xi1> to vector<1x8x8xi1>
    %18 = vector.broadcast %17 : vector<1x8x8xi1> to vector<4x8x8xi1>
    %19 = vector.broadcast %cst_16 : f32 to vector<4x8x8xf32>
    %20 = arith.select %18, %19, %11 : vector<4x8x8xi1>, vector<4x8x8xf32>
    %cst_17 = arith.constant dense<0xFF800000> : vector<4x8xf32>
    %21 = vector.multi_reduction <maximumf>, %20, %cst_17 [2] : vector<4x8x8xf32> to vector<4x8xf32>
    %22 = vector.shape_cast %21 : vector<4x8xf32> to vector<4x8x1xf32>
    %23 = vector.broadcast %22 : vector<4x8x1xf32> to vector<4x8x8xf32>
    %24 = arith.subf %20, %23 : vector<4x8x8xf32>
    %25 = math.exp %24 : vector<4x8x8xf32>
    %cst_18 = arith.constant dense<0.000000e+00> : vector<4x8xf32>
    %26 = vector.multi_reduction <add>, %25, %cst_18 [2] : vector<4x8x8xf32> to vector<4x8xf32>
    %27 = vector.shape_cast %26 : vector<4x8xf32> to vector<4x8x1xf32>
    %28 = tpu.reciprocal %27 {approx = true} : vector<4x8x1xf32> -> vector<4x8x1xf32>
    %29 = vector.broadcast %28 : vector<4x8x1xf32> to vector<4x8x8xf32>
    %30 = arith.mulf %25, %29 : vector<4x8x8xf32>
    %31 = arith.truncf %30 : vector<4x8x8xf32> to vector<4x8x8xbf16>
    "tpu.trace_start"() <{level = 10 : i32, message = "hqk,hkd->hqd"}> : () -> ()
    %cst_19 = arith.constant dense<0.000000e+00> : vector<4x8x8xf32>
    %32 = tpu.matmul %31, %8, %cst_19 {dimension_numbers = #tpu.dot_dimension_numbers<[2], [1], [1], [2], [0, 0, 0, 1, 1, 2], [0], [0]>} : vector<4x8x8xbf16>, vector<4x8x8xbf16>, vector<4x8x8xf32> -> vector<4x8x8xf32>
    "tpu.trace_stop"() : () -> ()
    %c0_20 = arith.constant 0 : index
    %c0_21 = arith.constant 0 : index
    %c0_22 = arith.constant 0 : index
    %c0_23 = arith.constant 0 : index
    %33 = vector.load %arg5[%c0_20, %c0_21, %c0_22, %c0_23] : memref<1x4x8x8xf32, #tpu.memory_space<vmem>>, vector<1x4x8x8xf32>
    %34 = vector.shape_cast %33 : vector<1x4x8x8xf32> to vector<4x8x8xf32>
    %35 = vector.shape_cast %32 : vector<4x8x8xf32> to vector<1x4x8x8xf32>
    tpu.vector_store %arg5[%c0_20, %c0_21, %c0_22, %c0_23], %35 {strides = array<i32>} : memref<1x4x8x8xf32, #tpu.memory_space<vmem>>, vector<1x4x8x8xf32>,
    return
  }
  func.func @transform_0(%arg0: i32) -> (i32, i32, i32, i32) {
    %c0_i32 = arith.constant 0 : i32
    %c0_i32_0 = arith.constant 0 : i32
    %c0_i32_1 = arith.constant 0 : i32
    %c0_i32_2 = arith.constant 0 : i32
    return %arg0, %c0_i32, %c0_i32_0, %c0_i32_1 : i32, i32, i32, i32
  }
  func.func @transform_1(%arg0: i32) -> (i32, i32, i32, i32) {
    %c0_i32 = arith.constant 0 : i32
    %c0_i32_0 = arith.constant 0 : i32
    %c0_i32_1 = arith.constant 0 : i32
    %c0_i32_2 = arith.constant 0 : i32
    return %arg0, %c0_i32, %c0_i32_0, %c0_i32_1 : i32, i32, i32, i32
  }
  func.func @transform_2(%arg0: i32) -> (i32, i32, i32, i32) {
    %c0_i32 = arith.constant 0 : i32
    %c0_i32_0 = arith.constant 0 : i32
    %c0_i32_1 = arith.constant 0 : i32
    %c0_i32_2 = arith.constant 0 : i32
    return %arg0, %c0_i32, %c0_i32_0, %c0_i32_1 : i32, i32, i32, i32
  }
  func.func @transform_3(%arg0: i32) -> (i32, i32, i32) {
    %c0_i32 = arith.constant 0 : i32
    %c0_i32_0 = arith.constant 0 : i32
    %c0_i32_1 = arith.constant 0 : i32
    return %arg0, %c0_i32, %c0_i32_0 : i32, i32, i32
  }
  func.func @transform_4(%arg0: i32) -> (i32, i32, i32, i32) {
    %c0_i32 = arith.constant 0 : i32
    %c0_i32_0 = arith.constant 0 : i32
    %c0_i32_1 = arith.constant 0 : i32
    %c0_i32_2 = arith.constant 0 : i32
    return %arg0, %c0_i32, %c0_i32_0, %c0_i32_1 : i32, i32, i32, i32
  }
}

module attributes {stable_mosaic.version = 11 : i64} {
  func.func @_linear_kernel(%arg0: i32, %arg1: i32, %arg2: memref<16x32xf32, #tpu.memory_space<vmem>>, %arg3: memref<32x32xbf16, #tpu.memory_space<vmem>>, %arg4: memref<1x32xf32, #tpu.memory_space<vmem>>, %arg5: memref<16x32xf32, #tpu.memory_space<vmem>>) attributes {dimension_semantics = [#tpu.dimension_semantics<parallel>, #tpu.dimension_semantics<parallel>], iteration_bounds = array<i64: 1, 1>, scalar_prefetch = 0 : i64, scratch_operands = 0 : i64, tpu.core_type = #tpu.core_type<tc>, window_params = [{transform_indices = @transform_0, window_bounds = array<i64: 16, 32>}, {transform_indices = @transform_1, window_bounds = array<i64: 32, 32>}, {transform_indices = @transform_2, window_bounds = array<i64: 1, 32>}, {transform_indices = @transform_3, window_bounds = array<i64: 16, 32>}]} {
    %c0 = arith.constant 0 : index
    %c0_0 = arith.constant 0 : index
    %0 = vector.load %arg2[%c0, %c0_0] : memref<16x32xf32, #tpu.memory_space<vmem>>, vector<16x32xf32>
    %1 = arith.truncf %0 : vector<16x32xf32> to vector<16x32xbf16>
    %c0_1 = arith.constant 0 : index
    %c0_2 = arith.constant 0 : index
    %2 = vector.load %arg3[%c0_1, %c0_2] : memref<32x32xbf16, #tpu.memory_space<vmem>>, vector<32x32xbf16>
    %cst = arith.constant dense<0.000000e+00> : vector<16x32xf32>
    %3 = tpu.matmul %1, %2, %cst {dimension_numbers = #tpu.dot_dimension_numbers<[1], [0], [0], [1], [0, 0, 1, 1], [], []>} : vector<16x32xbf16>, vector<32x32xbf16>, vector<16x32xf32> -> vector<16x32xf32>
    %c0_3 = arith.constant 0 : index
    %c0_4 = arith.constant 0 : index
    %4 = vector.load %arg4[%c0_3, %c0_4] : memref<1x32xf32, #tpu.memory_space<vmem>>, vector<1x32xf32>
    %5 = vector.broadcast %4 : vector<1x32xf32> to vector<16x32xf32>
    %6 = arith.addf %3, %5 : vector<16x32xf32>
    %c0_5 = arith.constant 0 : index
    %c0_6 = arith.constant 0 : index
    %7 = vector.load %arg5[%c0_5, %c0_6] : memref<16x32xf32, #tpu.memory_space<vmem>>, vector<16x32xf32>
    tpu.vector_store %arg5[%c0_5, %c0_6], %6 {strides = array<i32>} : memref<16x32xf32, #tpu.memory_space<vmem>>, vector<16x32xf32>,
    return
  }
  func.func @transform_0(%arg0: i32, %arg1: i32) -> (i32, i32) {
    %c0_i32 = arith.constant 0 : i32
    %c0_i32_0 = arith.constant 0 : i32
    return %arg0, %c0_i32 : i32, i32
  }
  func.func @transform_1(%arg0: i32, %arg1: i32) -> (i32, i32) {
    %c0_i32 = arith.constant 0 : i32
    %c0_i32_0 = arith.constant 0 : i32
    return %c0_i32, %arg1 : i32, i32
  }
  func.func @transform_2(%arg0: i32, %arg1: i32) -> (i32, i32) {
    %c0_i32 = arith.constant 0 : i32
    %c0_i32_0 = arith.constant 0 : i32
    return %c0_i32, %arg1 : i32, i32
  }
  func.func @transform_3(%arg0: i32, %arg1: i32) -> (i32, i32) {
    %c0_i32 = arith.constant 0 : i32
    return %arg0, %arg1 : i32, i32
  }
}

module attributes {stable_mosaic.version = 11 : i64} {
  func.func @_add_ln_kernel(%arg0: i32, %arg1: memref<16x32xf32, #tpu.memory_space<vmem>>, %arg2: memref<16x32xf32, #tpu.memory_space<vmem>>, %arg3: memref<1x32xf32, #tpu.memory_space<vmem>>, %arg4: memref<1x32xf32, #tpu.memory_space<vmem>>, %arg5: memref<16x32xf32, #tpu.memory_space<vmem>>) attributes {dimension_semantics = [#tpu.dimension_semantics<parallel>], iteration_bounds = array<i64: 1>, scalar_prefetch = 0 : i64, scratch_operands = 0 : i64, tpu.core_type = #tpu.core_type<tc>, window_params = [{transform_indices = @transform_0, window_bounds = array<i64: 16, 32>}, {transform_indices = @transform_1, window_bounds = array<i64: 16, 32>}, {pipeline_mode = #tpu.pipeline_mode<synchronous>, transform_indices = @transform_2, window_bounds = array<i64: 1, 32>}, {pipeline_mode = #tpu.pipeline_mode<synchronous>, transform_indices = @transform_3, window_bounds = array<i64: 1, 32>}, {transform_indices = @transform_4, window_bounds = array<i64: 16, 32>}]} {
    %c0 = arith.constant 0 : index
    %c0_0 = arith.constant 0 : index
    %0 = vector.load %arg1[%c0, %c0_0] : memref<16x32xf32, #tpu.memory_space<vmem>>, vector<16x32xf32>
    %c0_1 = arith.constant 0 : index
    %c0_2 = arith.constant 0 : index
    %1 = vector.load %arg2[%c0_1, %c0_2] : memref<16x32xf32, #tpu.memory_space<vmem>>, vector<16x32xf32>
    %2 = arith.addf %0, %1 : vector<16x32xf32>
    %cst = arith.constant dense<0.000000e+00> : vector<16xf32>
    %3 = vector.multi_reduction <add>, %2, %cst [1] : vector<16x32xf32> to vector<16xf32>
    %4 = vector.shape_cast %3 : vector<16xf32> to vector<16x1xf32>
    %cst_3 = arith.constant 3.200000e+01 : f32
    %5 = vector.broadcast %cst_3 : f32 to vector<16x1xf32>
    %6 = arith.divf %4, %5 : vector<16x1xf32>
    %7 = vector.broadcast %6 : vector<16x1xf32> to vector<16x32xf32>
    %8 = arith.subf %2, %7 : vector<16x32xf32>
    %9 = arith.mulf %8, %8 : vector<16x32xf32>
    %cst_4 = arith.constant dense<0.000000e+00> : vector<16xf32>
    %10 = vector.multi_reduction <add>, %9, %cst_4 [1] : vector<16x32xf32> to vector<16xf32>
    %11 = vector.shape_cast %10 : vector<16xf32> to vector<16x1xf32>
    %cst_5 = arith.constant 3.200000e+01 : f32
    %12 = vector.broadcast %cst_5 : f32 to vector<16x1xf32>
    %13 = arith.divf %11, %12 : vector<16x1xf32>
    %14 = vector.broadcast %6 : vector<16x1xf32> to vector<16x32xf32>
    %15 = arith.subf %2, %14 : vector<16x32xf32>
    %cst_6 = arith.constant 9.99999974E-6 : f32
    %16 = vector.broadcast %cst_6 : f32 to vector<16x1xf32>
    %17 = arith.addf %13, %16 : vector<16x1xf32>
    %18 = math.rsqrt %17 : vector<16x1xf32>
    %19 = vector.broadcast %18 : vector<16x1xf32> to vector<16x32xf32>
    %20 = arith.mulf %15, %19 : vector<16x32xf32>
    %c0_7 = arith.constant 0 : index
    %c0_8 = arith.constant 0 : index
    %21 = vector.load %arg3[%c0_7, %c0_8] : memref<1x32xf32, #tpu.memory_space<vmem>>, vector<1x32xf32>
    %22 = vector.broadcast %21 : vector<1x32xf32> to vector<16x32xf32>
    %23 = arith.mulf %20, %22 : vector<16x32xf32>
    %c0_9 = arith.constant 0 : index
    %c0_10 = arith.constant 0 : index
    %24 = vector.load %arg4[%c0_9, %c0_10] : memref<1x32xf32, #tpu.memory_space<vmem>>, vector<1x32xf32>
    %25 = vector.broadcast %24 : vector<1x32xf32> to vector<16x32xf32>
    %26 = arith.addf %23, %25 : vector<16x32xf32>
    %c0_11 = arith.constant 0 : index
    %c0_12 = arith.constant 0 : index
    %27 = vector.load %arg5[%c0_11, %c0_12] : memref<16x32xf32, #tpu.memory_space<vmem>>, vector<16x32xf32>
    tpu.vector_store %arg5[%c0_11, %c0_12], %26 {strides = array<i32>} : memref<16x32xf32, #tpu.memory_space<vmem>>, vector<16x32xf32>,
    return
  }
  func.func @transform_0(%arg0: i32) -> (i32, i32) {
    %c0_i32 = arith.constant 0 : i32
    %c0_i32_0 = arith.constant 0 : i32
    return %arg0, %c0_i32 : i32, i32
  }
  func.func @transform_1(%arg0: i32) -> (i32, i32) {
    %c0_i32 = arith.constant 0 : i32
    %c0_i32_0 = arith.constant 0 : i32
    return %arg0, %c0_i32 : i32, i32
  }
  func.func @transform_2(%arg0: i32) -> (i32, i32) {
    %c0_i32 = arith.constant 0 : i32
    %c0_i32_0 = arith.constant 0 : i32
    %c0_i32_1 = arith.constant 0 : i32
    return %c0_i32, %c0_i32_0 : i32, i32
  }
  func.func @transform_3(%arg0: i32) -> (i32, i32) {
    %c0_i32 = arith.constant 0 : i32
    %c0_i32_0 = arith.constant 0 : i32
    %c0_i32_1 = arith.constant 0 : i32
    return %c0_i32, %c0_i32_0 : i32, i32
  }
  func.func @transform_4(%arg0: i32) -> (i32, i32) {
    %c0_i32 = arith.constant 0 : i32
    %c0_i32_0 = arith.constant 0 : i32
    return %arg0, %c0_i32 : i32, i32
  }
}

module attributes {stable_mosaic.version = 11 : i64} {
  func.func @_mha_kernel(%arg0: i32, %arg1: memref<1x4x8x8xf32, #tpu.memory_space<vmem>>, %arg2: memref<1x4x8x8xf32, #tpu.memory_space<vmem>>, %arg3: memref<1x4x8x8xf32, #tpu.memory_space<vmem>>, %arg4: memref<1x1x8xf32, #tpu.memory_space<vmem>>, %arg5: memref<1x4x8x8xf32, #tpu.memory_space<vmem>>) attributes {dimension_semantics = [#tpu.dimension_semantics<parallel>], iteration_bounds = array<i64: 2>, scalar_prefetch = 0 : i64, scratch_operands = 0 : i64, tpu.core_type = #tpu.core_type<tc>, window_params = [{transform_indices = @transform_0, window_bounds = array<i64: 1, 4, 8, 8>}, {transform_indices = @transform_1, window_bounds = array<i64: 1, 4, 8, 8>}, {transform_indices = @transform_2, window_bounds = array<i64: 1, 4, 8, 8>}, {transform_indices = @transform_3, window_bounds = array<i64: 1, 1, 8>}, {transform_indices = @transform_4, window_bounds = array<i64: 1, 4, 8, 8>}]} {
    %c0 = arith.constant 0 : index
    %c0_0 = arith.constant 0 : index
    %c0_1 = arith.constant 0 : index
    %c0_2 = arith.constant 0 : index
    %0 = vector.load %arg1[%c0, %c0_0, %c0_1, %c0_2] : memref<1x4x8x8xf32, #tpu.memory_space<vmem>>, vector<1x4x8x8xf32>
    %1 = vector.shape_cast %0 : vector<1x4x8x8xf32> to vector<4x8x8xf32>
    %2 = arith.truncf %1 : vector<4x8x8xf32> to vector<4x8x8xbf16>
    %c0_3 = arith.constant 0 : index
    %c0_4 = arith.constant 0 : index
    %c0_5 = arith.constant 0 : index
    %c0_6 = arith.constant 0 : index
    %3 = vector.load %arg2[%c0_3, %c0_4, %c0_5, %c0_6] : memref<1x4x8x8xf32, #tpu.memory_space<vmem>>, vector<1x4x8x8xf32>
    %4 = vector.shape_cast %3 : vector<1x4x8x8xf32> to vector<4x8x8xf32>
    %5 = arith.truncf %4 : vector<4x8x8xf32> to vector<4x8x8xbf16>
    %c0_7 = arith.constant 0 : index
    %c0_8 = arith.constant 0 : index
    %c0_9 = arith.constant 0 : index
    %c0_10 = arith.constant 0 : index
    %6 = vector.load %arg3[%c0_7, %c0_8, %c0_9, %c0_10] : memref<1x4x8x8xf32, #tpu.memory_space<vmem>>, vector<1x4x8x8xf32>
    %7 = vector.shape_cast %6 : vector<1x4x8x8xf32> to vector<4x8x8xf32>
    %8 = arith.truncf %7 : vector<4x8x8xf32> to vector<4x8x8xbf16>
    "tpu.trace_start"() <{level = 10 : i32, message = "hqd,hkd->hqk"}> : () -> ()
    %cst = arith.constant dense<0.000000e+00> : vector<4x8x8xf32>
    %9 = tpu.matmul %2, %5, %cst {dimension_numbers = #tpu.dot_dimension_numbers<[2], [2], [1], [1], [0, 0, 0, 1, 1, 1], [0], [0]>} : vector<4x8x8xbf16>, vector<4x8x8xbf16>, vector<4x8x8xf32> -> vector<4x8x8xf32>
    "tpu.trace_stop"() : () -> ()
    %cst_11 = arith.constant 0.353553385 : f32
    %10 = vector.broadcast %cst_11 : f32 to vector<4x8x8xf32>
    %11 = arith.mulf %9, %10 : vector<4x8x8xf32>
    %c0_12 = arith.constant 0 : index
    %c0_13 = arith.constant 0 : index
    %c0_14 = arith.constant 0 : index
    %12 = vector.load %arg4[%c0_12, %c0_13, %c0_14] : memref<1x1x8xf32, #tpu.memory_space<vmem>>, vector<1x1x8xf32>
    %13 = vector.shape_cast %12 : vector<1x1x8xf32> to vector<1x8xf32>
    %14 = vector.shape_cast %13 : vector<1x8xf32> to vector<1x8xf32>
    %15 = vector.broadcast %14 : vector<1x8xf32> to vector<8x8xf32>
    %cst_15 = arith.constant 0.000000e+00 : f32
    %16 = vector.broadcast %cst_15 : f32 to vector<8x8xf32>
    %17 = arith.cmpf oeq, %15, %16 : vector<8x8xf32>
    %18 = vector.shape_cast %17 : vector<8x8xi1> to vector<1x8x8xi1>
    %cst_16 = arith.constant -1.000000e+09 : f32
    %19 = vector.shape_cast %18 : vector<1x8x8xi1> to vector<1x8x8xi1>
    %20 = vector.broadcast %19 : vector<1x8x8xi1> to vector<4x8x8xi1>
    %21 = vector.broadcast %cst_16 : f32 to vector<4x8x8xf32>
    %22 = arith.select %20, %21, %11 : vector<4x8x8xi1>, vector<4x8x8xf32>
    %cst_17 = arith.constant dense<0xFF800000> : vector<4x8xf32>
    %23 = vector.multi_reduction <maximumf>, %22, %cst_17 [2] : vector<4x8x8xf32> to vector<4x8xf32>
    %24 = vector.shape_cast %23 : vector<4x8xf32> to vector<4x8x1xf32>
    %25 = vector.broadcast %24 : vector<4x8x1xf32> to vector<4x8x8xf32>
    %26 = arith.subf %22, %25 : vector<4x8x8xf32>
    %27 = math.exp %26 : vector<4x8x8xf32>
    %cst_18 = arith.constant dense<0.000000e+00> : vector<4x8xf32>
    %28 = vector.multi_reduction <add>, %27, %cst_18 [2] : vector<4x8x8xf32> to vector<4x8xf32>
    %29 = vector.shape_cast %28 : vector<4x8xf32> to vector<4x8x1xf32>
    %30 = tpu.reciprocal %29 {approx = true} : vector<4x8x1xf32> -> vector<4x8x1xf32>
    %31 = vector.broadcast %30 : vector<4x8x1xf32> to vector<4x8x8xf32>
    %32 = arith.mulf %27, %31 : vector<4x8x8xf32>
    %33 = arith.truncf %32 : vector<4x8x8xf32> to vector<4x8x8xbf16>
    "tpu.trace_start"() <{level = 10 : i32, message = "hqk,hkd->hqd"}> : () -> ()
    %cst_19 = arith.constant dense<0.000000e+00> : vector<4x8x8xf32>
    %34 = tpu.matmul %33, %8, %cst_19 {dimension_numbers = #tpu.dot_dimension_numbers<[2], [1], [1], [2], [0, 0, 0, 1, 1, 2], [0], [0]>} : vector<4x8x8xbf16>, vector<4x8x8xbf16>, vector<4x8x8xf32> -> vector<4x8x8xf32>
    "tpu.trace_stop"() : () -> ()
    %c0_20 = arith.constant 0 : index
    %c0_21 = arith.constant 0 : index
    %c0_22 = arith.constant 0 : index
    %c0_23 = arith.constant 0 : index
    %35 = vector.load %arg5[%c0_20, %c0_21, %c0_22, %c0_23] : memref<1x4x8x8xf32, #tpu.memory_space<vmem>>, vector<1x4x8x8xf32>
    %36 = vector.shape_cast %35 : vector<1x4x8x8xf32> to vector<4x8x8xf32>
    %37 = vector.shape_cast %34 : vector<4x8x8xf32> to vector<1x4x8x8xf32>
    tpu.vector_store %arg5[%c0_20, %c0_21, %c0_22, %c0_23], %37 {strides = array<i32>} : memref<1x4x8x8xf32, #tpu.memory_space<vmem>>, vector<1x4x8x8xf32>,
    return
  }
  func.func @transform_0(%arg0: i32) -> (i32, i32, i32, i32) {
    %c0_i32 = arith.constant 0 : i32
    %c0_i32_0 = arith.constant 0 : i32
    %c0_i32_1 = arith.constant 0 : i32
    %c0_i32_2 = arith.constant 0 : i32
    return %arg0, %c0_i32, %c0_i32_0, %c0_i32_1 : i32, i32, i32, i32
  }
  func.func @transform_1(%arg0: i32) -> (i32, i32, i32, i32) {
    %c0_i32 = arith.constant 0 : i32
    %c0_i32_0 = arith.constant 0 : i32
    %c0_i32_1 = arith.constant 0 : i32
    %c0_i32_2 = arith.constant 0 : i32
    return %arg0, %c0_i32, %c0_i32_0, %c0_i32_1 : i32, i32, i32, i32
  }
  func.func @transform_2(%arg0: i32) -> (i32, i32, i32, i32) {
    %c0_i32 = arith.constant 0 : i32
    %c0_i32_0 = arith.constant 0 : i32
    %c0_i32_1 = arith.constant 0 : i32
    %c0_i32_2 = arith.constant 0 : i32
    return %arg0, %c0_i32, %c0_i32_0, %c0_i32_1 : i32, i32, i32, i32
  }
  func.func @transform_3(%arg0: i32) -> (i32, i32, i32) {
    %c0_i32 = arith.constant 0 : i32
    %c0_i32_0 = arith.constant 0 : i32
    %c0_i32_1 = arith.constant 0 : i32
    return %arg0, %c0_i32, %c0_i32_0 : i32, i32, i32
  }
  func.func @transform_4(%arg0: i32) -> (i32, i32, i32, i32) {
    %c0_i32 = arith.constant 0 : i32
    %c0_i32_0 = arith.constant 0 : i32
    %c0_i32_1 = arith.constant 0 : i32
    %c0_i32_2 = arith.constant 0 : i32
    return %arg0, %c0_i32, %c0_i32_0, %c0_i32_1 : i32, i32, i32, i32
  }
}

module attributes {stable_mosaic.version = 11 : i64} {
  func.func @_ffn_kernel(%arg0: i32, %arg1: memref<16x32xf32, #tpu.memory_space<vmem>>, %arg2: memref<32x128xbf16, #tpu.memory_space<vmem>>, %arg3: memref<1x128xf32, #tpu.memory_space<vmem>>, %arg4: memref<128x32xbf16, #tpu.memory_space<vmem>>, %arg5: memref<1x32xf32, #tpu.memory_space<vmem>>, %arg6: memref<16x32xf32, #tpu.memory_space<vmem>>) attributes {dimension_semantics = [#tpu.dimension_semantics<parallel>], iteration_bounds = array<i64: 1>, scalar_prefetch = 0 : i64, scratch_operands = 0 : i64, tpu.core_type = #tpu.core_type<tc>, window_params = [{transform_indices = @transform_0, window_bounds = array<i64: 16, 32>}, {pipeline_mode = #tpu.pipeline_mode<synchronous>, transform_indices = @transform_1, window_bounds = array<i64: 32, 128>}, {pipeline_mode = #tpu.pipeline_mode<synchronous>, transform_indices = @transform_2, window_bounds = array<i64: 1, 128>}, {pipeline_mode = #tpu.pipeline_mode<synchronous>, transform_indices = @transform_3, window_bounds = array<i64: 128, 32>}, {pipeline_mode = #tpu.pipeline_mode<synchronous>, transform_indices = @transform_4, window_bounds = array<i64: 1, 32>}, {transform_indices = @transform_5, window_bounds = array<i64: 16, 32>}]} {
    %c0 = arith.constant 0 : index
    %c0_0 = arith.constant 0 : index
    %0 = vector.load %arg1[%c0, %c0_0] : memref<16x32xf32, #tpu.memory_space<vmem>>, vector<16x32xf32>
    %1 = arith.truncf %0 : vector<16x32xf32> to vector<16x32xbf16>
    %c0_1 = arith.constant 0 : index
    %c0_2 = arith.constant 0 : index
    %2 = vector.load %arg2[%c0_1, %c0_2] : memref<32x128xbf16, #tpu.memory_space<vmem>>, vector<32x128xbf16>
    %cst = arith.constant dense<0.000000e+00> : vector<16x128xf32>
    %3 = tpu.matmul %1, %2, %cst {dimension_numbers = #tpu.dot_dimension_numbers<[1], [0], [0], [1], [0, 0, 1, 1], [], []>} : vector<16x32xbf16>, vector<32x128xbf16>, vector<16x128xf32> -> vector<16x128xf32>
    %c0_3 = arith.constant 0 : index
    %c0_4 = arith.constant 0 : index
    %4 = vector.load %arg3[%c0_3, %c0_4] : memref<1x128xf32, #tpu.memory_space<vmem>>, vector<1x128xf32>
    %5 = vector.broadcast %4 : vector<1x128xf32> to vector<16x128xf32>
    %6 = arith.addf %3, %5 : vector<16x128xf32>
    %cst_5 = arith.constant 0.000000e+00 : f32
    %7 = vector.broadcast %cst_5 : f32 to vector<16x128xf32>
    %8 = arith.maximumf %6, %7 : vector<16x128xf32>
    %9 = arith.truncf %8 : vector<16x128xf32> to vector<16x128xbf16>
    %c0_6 = arith.constant 0 : index
    %c0_7 = arith.constant 0 : index
    %10 = vector.load %arg4[%c0_6, %c0_7] : memref<128x32xbf16, #tpu.memory_space<vmem>>, vector<128x32xbf16>
    %cst_8 = arith.constant dense<0.000000e+00> : vector<16x32xf32>
    %11 = tpu.matmul %9, %10, %cst_8 {dimension_numbers = #tpu.dot_dimension_numbers<[1], [0], [0], [1], [0, 0, 1, 1], [], []>} : vector<16x128xbf16>, vector<128x32xbf16>, vector<16x32xf32> -> vector<16x32xf32>
    %c0_9 = arith.constant 0 : index
    %c0_10 = arith.constant 0 : index
    %12 = vector.load %arg5[%c0_9, %c0_10] : memref<1x32xf32, #tpu.memory_space<vmem>>, vector<1x32xf32>
    %13 = vector.broadcast %12 : vector<1x32xf32> to vector<16x32xf32>
    %14 = arith.addf %11, %13 : vector<16x32xf32>
    %c0_11 = arith.constant 0 : index
    %c0_12 = arith.constant 0 : index
    %15 = vector.load %arg6[%c0_11, %c0_12] : memref<16x32xf32, #tpu.memory_space<vmem>>, vector<16x32xf32>
    tpu.vector_store %arg6[%c0_11, %c0_12], %14 {strides = array<i32>} : memref<16x32xf32, #tpu.memory_space<vmem>>, vector<16x32xf32>,
    return
  }
  func.func @transform_0(%arg0: i32) -> (i32, i32) {
    %c0_i32 = arith.constant 0 : i32
    %c0_i32_0 = arith.constant 0 : i32
    return %arg0, %c0_i32 : i32, i32
  }
  func.func @transform_1(%arg0: i32) -> (i32, i32) {
    %c0_i32 = arith.constant 0 : i32
    %c0_i32_0 = arith.constant 0 : i32
    %c0_i32_1 = arith.constant 0 : i32
    return %c0_i32, %c0_i32_0 : i32, i32
  }
  func.func @transform_2(%arg0: i32) -> (i32, i32) {
    %c0_i32 = arith.constant 0 : i32
    %c0_i32_0 = arith.constant 0 : i32
    %c0_i32_1 = arith.constant 0 : i32
    return %c0_i32, %c0_i32_0 : i32, i32
  }
  func.func @transform_3(%arg0: i32) -> (i32, i32) {
    %c0_i32 = arith.constant 0 : i32
    %c0_i32_0 = arith.constant 0 : i32
    %c0_i32_1 = arith.constant 0 : i32
    return %c0_i32, %c0_i32_0 : i32, i32
  }
  func.func @transform_4(%arg0: i32) -> (i32, i32) {
    %c0_i32 = arith.constant 0 : i32
    %c0_i32_0 = arith.constant 0 : i32
    %c0_i32_1 = arith.constant 0 : i32
    return %c0_i32, %c0_i32_0 : i32, i32
  }
  func.func @transform_5(%arg0: i32) -> (i32, i32) {
    %c0_i32 = arith.constant 0 : i32
    %c0_i32_0 = arith.constant 0 : i32
    return %arg0, %c0_i32 : i32, i32
  }
}

module attributes {stable_mosaic.version = 11 : i64} {
  func.func @_linear_kernel(%arg0: i32, %arg1: i32, %arg2: memref<16x32xf32, #tpu.memory_space<vmem>>, %arg3: memref<32x64xbf16, #tpu.memory_space<vmem>>, %arg4: memref<1x64xf32, #tpu.memory_space<vmem>>, %arg5: memref<16x64xf32, #tpu.memory_space<vmem>>) attributes {dimension_semantics = [#tpu.dimension_semantics<parallel>, #tpu.dimension_semantics<parallel>], iteration_bounds = array<i64: 1, 1>, scalar_prefetch = 0 : i64, scratch_operands = 0 : i64, tpu.core_type = #tpu.core_type<tc>, window_params = [{transform_indices = @transform_0, window_bounds = array<i64: 16, 32>}, {transform_indices = @transform_1, window_bounds = array<i64: 32, 64>}, {transform_indices = @transform_2, window_bounds = array<i64: 1, 64>}, {transform_indices = @transform_3, window_bounds = array<i64: 16, 64>}]} {
    %c0 = arith.constant 0 : index
    %c0_0 = arith.constant 0 : index
    %0 = vector.load %arg2[%c0, %c0_0] : memref<16x32xf32, #tpu.memory_space<vmem>>, vector<16x32xf32>
    %1 = arith.truncf %0 : vector<16x32xf32> to vector<16x32xbf16>
    %c0_1 = arith.constant 0 : index
    %c0_2 = arith.constant 0 : index
    %2 = vector.load %arg3[%c0_1, %c0_2] : memref<32x64xbf16, #tpu.memory_space<vmem>>, vector<32x64xbf16>
    %cst = arith.constant dense<0.000000e+00> : vector<16x64xf32>
    %3 = tpu.matmul %1, %2, %cst {dimension_numbers = #tpu.dot_dimension_numbers<[1], [0], [0], [1], [0, 0, 1, 1], [], []>} : vector<16x32xbf16>, vector<32x64xbf16>, vector<16x64xf32> -> vector<16x64xf32>
    %c0_3 = arith.constant 0 : index
    %c0_4 = arith.constant 0 : index
    %4 = vector.load %arg4[%c0_3, %c0_4] : memref<1x64xf32, #tpu.memory_space<vmem>>, vector<1x64xf32>
    %5 = vector.broadcast %4 : vector<1x64xf32> to vector<16x64xf32>
    %6 = arith.addf %3, %5 : vector<16x64xf32>
    %c0_5 = arith.constant 0 : index
    %c0_6 = arith.constant 0 : index
    %7 = vector.load %arg5[%c0_5, %c0_6] : memref<16x64xf32, #tpu.memory_space<vmem>>, vector<16x64xf32>
    tpu.vector_store %arg5[%c0_5, %c0_6], %6 {strides = array<i32>} : memref<16x64xf32, #tpu.memory_space<vmem>>, vector<16x64xf32>,
    return
  }
  func.func @transform_0(%arg0: i32, %arg1: i32) -> (i32, i32) {
    %c0_i32 = arith.constant 0 : i32
    %c0_i32_0 = arith.constant 0 : i32
    return %arg0, %c0_i32 : i32, i32
  }
  func.func @transform_1(%arg0: i32, %arg1: i32) -> (i32, i32) {
    %c0_i32 = arith.constant 0 : i32
    %c0_i32_0 = arith.constant 0 : i32
    return %c0_i32, %arg1 : i32, i32
  }
  func.func @transform_2(%arg0: i32, %arg1: i32) -> (i32, i32) {
    %c0_i32 = arith.constant 0 : i32
    %c0_i32_0 = arith.constant 0 : i32
    return %c0_i32, %arg1 : i32, i32
  }
  func.func @transform_3(%arg0: i32, %arg1: i32) -> (i32, i32) {
    %c0_i32 = arith.constant 0 : i32
    return %arg0, %arg1 : i32, i32
  }
}

module attributes {stable_mosaic.version = 11 : i64} {
  func.func @_linear_kernel(%arg0: i32, %arg1: i32, %arg2: memref<16x32xf32, #tpu.memory_space<vmem>>, %arg3: memref<32x16xbf16, #tpu.memory_space<vmem>>, %arg4: memref<1x16xf32, #tpu.memory_space<vmem>>, %arg5: memref<16x16xf32, #tpu.memory_space<vmem>>) attributes {dimension_semantics = [#tpu.dimension_semantics<parallel>, #tpu.dimension_semantics<parallel>], iteration_bounds = array<i64: 1, 1>, scalar_prefetch = 0 : i64, scratch_operands = 0 : i64, tpu.core_type = #tpu.core_type<tc>, window_params = [{transform_indices = @transform_0, window_bounds = array<i64: 16, 32>}, {transform_indices = @transform_1, window_bounds = array<i64: 32, 16>}, {transform_indices = @transform_2, window_bounds = array<i64: 1, 16>}, {transform_indices = @transform_3, window_bounds = array<i64: 16, 16>}]} {
    %c0 = arith.constant 0 : index
    %c0_0 = arith.constant 0 : index
    %0 = vector.load %arg2[%c0, %c0_0] : memref<16x32xf32, #tpu.memory_space<vmem>>, vector<16x32xf32>
    %1 = arith.truncf %0 : vector<16x32xf32> to vector<16x32xbf16>
    %c0_1 = arith.constant 0 : index
    %c0_2 = arith.constant 0 : index
    %2 = vector.load %arg3[%c0_1, %c0_2] : memref<32x16xbf16, #tpu.memory_space<vmem>>, vector<32x16xbf16>
    %cst = arith.constant dense<0.000000e+00> : vector<16x16xf32>
    %3 = tpu.matmul %1, %2, %cst {dimension_numbers = #tpu.dot_dimension_numbers<[1], [0], [0], [1], [0, 0, 1, 1], [], []>} : vector<16x32xbf16>, vector<32x16xbf16>, vector<16x16xf32> -> vector<16x16xf32>
    %c0_3 = arith.constant 0 : index
    %c0_4 = arith.constant 0 : index
    %4 = vector.load %arg4[%c0_3, %c0_4] : memref<1x16xf32, #tpu.memory_space<vmem>>, vector<1x16xf32>
    %5 = vector.broadcast %4 : vector<1x16xf32> to vector<16x16xf32>
    %6 = arith.addf %3, %5 : vector<16x16xf32>
    %c0_5 = arith.constant 0 : index
    %c0_6 = arith.constant 0 : index
    %7 = vector.load %arg5[%c0_5, %c0_6] : memref<16x16xf32, #tpu.memory_space<vmem>>, vector<16x16xf32>
    tpu.vector_store %arg5[%c0_5, %c0_6], %6 {strides = array<i32>} : memref<16x16xf32, #tpu.memory_space<vmem>>, vector<16x16xf32>,
    return
  }
  func.func @transform_0(%arg0: i32, %arg1: i32) -> (i32, i32) {
    %c0_i32 = arith.constant 0 : i32
    %c0_i32_0 = arith.constant 0 : i32
    return %arg0, %c0_i32 : i32, i32
  }
  func.func @transform_1(%arg0: i32, %arg1: i32) -> (i32, i32) {
    %c0_i32 = arith.constant 0 : i32
    %c0_i32_0 = arith.constant 0 : i32
    return %c0_i32, %arg1 : i32, i32
  }
  func.func @transform_2(%arg0: i32, %arg1: i32) -> (i32, i32) {
    %c0_i32 = arith.constant 0 : i32
    %c0_i32_0 = arith.constant 0 : i32
    return %c0_i32, %arg1 : i32, i32
  }
  func.func @transform_3(%arg0: i32, %arg1: i32) -> (i32, i32) {
    %c0_i32 = arith.constant 0 : i32
    return %arg0, %arg1 : i32, i32
  }
}

</mosaic_0001>

<llo_original>
// kernel: transformer_forward.49
$region0: #{transformer_forward.49}
  #allocation0 [shape = 'u32[]', space=smem, size = 0x4, offset = 0x4, fixed_abs, tag = 'smem constant byte address 0x4 - core index']
  #allocation1 [shape = 'u32[144,128]{1,0:T(1,128)}', space=vmem, size = 0x12000, scoped, tag = 'internal scratch']
  %s0 = inlined_call_operand.vmem [shape: f32[16,32], index: 0, kind: input, shape index: {}]
  %s1 = inlined_call_operand.vmem [shape: bf16[32,32], index: 1, kind: input, shape index: {}]
  %s2 = inlined_call_operand.vmem [shape: f32[1,32], index: 2, kind: input, shape index: {}]
  %s3 = inlined_call_operand.vmem [shape: f32[16,32], index: 3, kind: output, shape index: {}]
  %s4 = sld [smem:[#allocation0]]
  $region22: #{transformer_forward.49} parent=0
    _
  %s6 = ssub.s32 1, %s4
  %s7 = scalar_select 0, %s6, %s4
  // Predicated region
  $region2: #{transformer_forward.49} parent=0 // pred_check
    _
  $region3: #{transformer_forward.49} parent=0 // pred_check_branch
    %9 = sbr.rel (0) target = $region5
  $region4: #{transformer_forward.49} parent=0 // pred_region
    _
  $region5: #{transformer_forward.49} parent=0 // pred_fallthru
    _
  // Predicated region
  $region6: #{transformer_forward.49} parent=0 // pred_check
    _
  $region7: #{transformer_forward.49} parent=0 // pred_check_branch
    %11 = sbr.rel (0) target = $region9
  $region8: #{transformer_forward.49} parent=0 // pred_region
    _
  $region9: #{transformer_forward.49} parent=0 // pred_fallthru
    _
  // Predicated region
  $region10: #{transformer_forward.49} parent=0 // pred_check
    _
  $region11: #{transformer_forward.49} parent=0 // pred_check_branch
    %13 = sbr.rel (0) target = $region13
  $region12: #{transformer_forward.49} parent=0 // pred_region
    _
  $region13: #{transformer_forward.49} parent=0 // pred_fallthru
    _
  %v15 = vld [vmem:[%s0] sm:$0xff]
  %v16 = vld [vmem:[%s0 + $0x8] sm:$0xff]
  %v17 = vpack.c.bf16 %v16, %v15
  %v18 = vld [vmem:[%s1] sm:$0xf]
  %v19 = vld [vmem:[%s1 + $0x4] sm:$0xf]
  %v20 = vld [vmem:[%s1 + $0x8] sm:$0xf]
  %v21 = vld [vmem:[%s1 + $0xc] sm:$0xf]
  %v22 = vld [vmem:[%s2] sm:$0x1]
  %v24 = vlaneseq
  %v25 = vshrl.u32 %v24, 7
  %v26 = vsub.s32 0, %v25
  %v27 = vrot.slane %v22, %v26
  %v33 = vunpack.c.l.b16 %v18
  %v34 = vunpack.c.l.b16 %v19
  %v35 = vunpack.c.l.b16 %v20
  %v36 = vunpack.c.l.b16 %v21
  %v37 = vpack.c.b16 %v34, %v33
  %v38 = vpack.c.b16 %v36, %v35
  %vm41 = vcmask 261120
  %v43 = vsel %vm41, %v17, 0
  %45 = vmatprep.subr.bf16.mxu0 0
  %46 = vmatpush1.bf16.msra.mxu0 0
  %47 = vmatprep.subr.bf16.mxu0 0
  %48 = vmatpush1.bf16.msra.mxu0 0
  %49 = vmatprep.subr.bf16.mxu0 0
  %50 = vmatpush1.bf16.msra.mxu0 0
  %51 = vmatprep.subr.bf16.mxu0 0
  %52 = vmatpush1.bf16.msra.mxu0 0
  %53 = vmatprep.subr.bf16.mxu0 0
  %54 = vmatpush1.bf16.msra.mxu0 0
  %55 = vmatprep.subr.bf16.mxu0 0
  %56 = vmatpush1.bf16.msra.mxu0 0
  %57 = vmatprep.subr.bf16.mxu0 0
  %58 = vmatpush1.bf16.msra.mxu0 %v38
  %59 = vmatprep.subr.bf16.mxu0 0
  %60 = vmatpush1.bf16.msra.mxu0 %v37
  %61 = vmatprep.subr.bf16.mxu0 0
  %62 = vmatpush2.bf16.msra.mxu0 0
  %63 = vmatprep.subr.bf16.mxu0 0
  %64 = vmatpush2.bf16.msra.mxu0 0
  %65 = vmatprep.subr.bf16.mxu0 0
  %66 = vmatpush2.bf16.msra.mxu0 0
  %67 = vmatprep.subr.bf16.mxu0 0
  %68 = vmatpush2.bf16.msra.mxu0 0
  %69 = vmatprep.subr.bf16.mxu0 0
  %70 = vmatpush2.bf16.msra.mxu0 0
  %71 = vmatprep.subr.bf16.mxu0 0
  %72 = vmatpush2.bf16.msra.mxu0 0
  %73 = vmatprep.subr.bf16.mxu0 0
  %74 = vmatpush2.bf16.msra.mxu0 0
  %75 = vmatprep.subr.bf16.mxu0 0
  %76 = vmatpush2.bf16.msra.mxu0 0
  %77 = vmatprep.mubr.bf16.mxu0 0
  %78 = vmatmul.mubr.bf16.gmra.mxu0 %v43
  %v79 = vpop.f32.mrf.mxu0
  %v80 = vadd.f32 %v27, %v79
  %v81 = vpop.f32.mrf.mxu0
  %v82 = vpop.f32.mrf.mxu0
  %v83 = vadd.f32 %v27, %v82
  %v84 = vpop.f32.mrf.mxu0
  %85 = vdwg.mxu0
  %86 = vst.msk [vmem:[%s3] sm:$0xff] %vm41, %v80
  %87 = vst.msk [vmem:[%s3 + $0x8] sm:$0xff] %vm41, %v83
  // Predicated region
  $region14: #{transformer_forward.49} parent=0 // pred_check
    _
  $region15: #{transformer_forward.49} parent=0 // pred_check_branch
    %89 = sbr.rel (0) target = $region17
  $region16: #{transformer_forward.49} parent=0 // pred_region
    _
  $region17: #{transformer_forward.49} parent=0 // pred_fallthru
    _
  // Predicated region
  $region18: #{transformer_forward.49} parent=0 // pred_check
    _
  $region19: #{transformer_forward.49} parent=0 // pred_check_branch
    %91 = sbr.rel (0) target = $region21
  $region20: #{transformer_forward.49} parent=0 // pred_region
    _
  $region21: #{transformer_forward.49} parent=0 // pred_fallthru
    _

// kernel: transformer_forward.47
$region0: #{transformer_forward.47}
  #allocation0 [shape = 'u32[]', space=smem, size = 0x4, offset = 0x4, fixed_abs, tag = 'smem constant byte address 0x4 - core index']
  #allocation1 [shape = 'u32[144,128]{1,0:T(1,128)}', space=vmem, size = 0x12000, scoped, tag = 'internal scratch']
  %s0 = inlined_call_operand.vmem [shape: f32[16,32], index: 0, kind: input, shape index: {}]
  %s1 = inlined_call_operand.vmem [shape: bf16[32,96], index: 1, kind: input, shape index: {}]
  %s2 = inlined_call_operand.vmem [shape: f32[1,96], index: 2, kind: input, shape index: {}]
  %s3 = inlined_call_operand.vmem [shape: f32[16,96], index: 3, kind: output, shape index: {}]
  %s4 = sld [smem:[#allocation0]]
  $region22: #{transformer_forward.47} parent=0
    _
  %s6 = ssub.s32 1, %s4
  %s7 = scalar_select 0, %s6, %s4
  // Predicated region
  $region2: #{transformer_forward.47} parent=0 // pred_check
    _
  $region3: #{transformer_forward.47} parent=0 // pred_check_branch
    %9 = sbr.rel (0) target = $region5
  $region4: #{transformer_forward.47} parent=0 // pred_region
    _
  $region5: #{transformer_forward.47} parent=0 // pred_fallthru
    _
  // Predicated region
  $region6: #{transformer_forward.47} parent=0 // pred_check
    _
  $region7: #{transformer_forward.47} parent=0 // pred_check_branch
    %11 = sbr.rel (0) target = $region9
  $region8: #{transformer_forward.47} parent=0 // pred_region
    _
  $region9: #{transformer_forward.47} parent=0 // pred_fallthru
    _
  // Predicated region
  $region10: #{transformer_forward.47} parent=0 // pred_check
    _
  $region11: #{transformer_forward.47} parent=0 // pred_check_branch
    %13 = sbr.rel (0) target = $region13
  $region12: #{transformer_forward.47} parent=0 // pred_region
    _
  $region13: #{transformer_forward.47} parent=0 // pred_fallthru
    _
  %v15 = vld [vmem:[%s0] sm:$0xff]
  %v16 = vld [vmem:[%s0 + $0x8] sm:$0xff]
  %v17 = vpack.c.bf16 %v16, %v15
  %v18 = vld [vmem:[%s1] sm:$0xf]
  %v19 = vld [vmem:[%s1 + $0x4] sm:$0xf]
  %v20 = vld [vmem:[%s1 + $0x8] sm:$0xf]
  %v21 = vld [vmem:[%s1 + $0xc] sm:$0xf]
  %v22 = vld [vmem:[%s2] sm:$0x1]
  %v24 = vlaneseq
  %v25 = vshrl.u32 %v24, 7
  %v26 = vsub.s32 0, %v25
  %v27 = vrot.slane %v22, %v26
  %v33 = vunpack.c.l.b16 %v18
  %v34 = vunpack.c.l.b16 %v19
  %v35 = vunpack.c.l.b16 %v20
  %v36 = vunpack.c.l.b16 %v21
  %v37 = vpack.c.b16 %v34, %v33
  %v38 = vpack.c.b16 %v36, %v35
  %vm41 = vcmask 261120
  %v43 = vsel %vm41, %v17, 0
  %45 = vmatprep.subr.bf16.mxu0 0
  %46 = vmatpush1.bf16.msra.mxu0 0
  %47 = vmatprep.subr.bf16.mxu0 0
  %48 = vmatpush1.bf16.msra.mxu0 0
  %49 = vmatprep.subr.bf16.mxu0 0
  %50 = vmatpush1.bf16.msra.mxu0 0
  %51 = vmatprep.subr.bf16.mxu0 0
  %52 = vmatpush1.bf16.msra.mxu0 0
  %53 = vmatprep.subr.bf16.mxu0 0
  %54 = vmatpush1.bf16.msra.mxu0 0
  %55 = vmatprep.subr.bf16.mxu0 0
  %56 = vmatpush1.bf16.msra.mxu0 0
  %57 = vmatprep.subr.bf16.mxu0 0
  %58 = vmatpush1.bf16.msra.mxu0 %v38
  %59 = vmatprep.subr.bf16.mxu0 0
  %60 = vmatpush1.bf16.msra.mxu0 %v37
  %61 = vmatprep.subr.bf16.mxu0 0
  %62 = vmatpush2.bf16.msra.mxu0 0
  %63 = vmatprep.subr.bf16.mxu0 0
  %64 = vmatpush2.bf16.msra.mxu0 0
  %65 = vmatprep.subr.bf16.mxu0 0
  %66 = vmatpush2.bf16.msra.mxu0 0
  %67 = vmatprep.subr.bf16.mxu0 0
  %68 = vmatpush2.bf16.msra.mxu0 0
  %69 = vmatprep.subr.bf16.mxu0 0
  %70 = vmatpush2.bf16.msra.mxu0 0
  %71 = vmatprep.subr.bf16.mxu0 0
  %72 = vmatpush2.bf16.msra.mxu0 0
  %73 = vmatprep.subr.bf16.mxu0 0
  %74 = vmatpush2.bf16.msra.mxu0 0
  %75 = vmatprep.subr.bf16.mxu0 0
  %76 = vmatpush2.bf16.msra.mxu0 0
  %77 = vmatprep.mubr.bf16.mxu0 0
  %78 = vmatmul.mubr.bf16.gmra.mxu0 %v43
  %v79 = vpop.f32.mrf.mxu0
  %v80 = vadd.f32 %v27, %v79
  %v81 = vpop.f32.mrf.mxu0
  %v82 = vpop.f32.mrf.mxu0
  %v83 = vadd.f32 %v27, %v82
  %v84 = vpop.f32.mrf.mxu0
  %85 = vdwg.mxu0
  %vm86 = vcmask 785408
  %87 = vst.msk [vmem:[%s3] sm:$0xff] %vm86, %v80
  %88 = vst.msk [vmem:[%s3 + $0x8] sm:$0xff] %vm86, %v83
  // Predicated region
  $region14: #{transformer_forward.47} parent=0 // pred_check
    _
  $region15: #{transformer_forward.47} parent=0 // pred_check_branch
    %90 = sbr.rel (0) target = $region17
  $region16: #{transformer_forward.47} parent=0 // pred_region
    _
  $region17: #{transformer_forward.47} parent=0 // pred_fallthru
    _
  // Predicated region
  $region18: #{transformer_forward.47} parent=0 // pred_check
    _
  $region19: #{transformer_forward.47} parent=0 // pred_check_branch
    %92 = sbr.rel (0) target = $region21
  $region20: #{transformer_forward.47} parent=0 // pred_region
    _
  $region21: #{transformer_forward.47} parent=0 // pred_fallthru
    _

// kernel: transformer_forward.48
$region0: #{transformer_forward.48}
  #allocation0 [shape = 'u32[]', space=smem, size = 0x4, offset = 0x4, fixed_abs, tag = 'smem constant byte address 0x4 - core index']
  #allocation1 [shape = 'u32[144,128]{1,0:T(1,128)}', space=vmem, size = 0x12000, scoped, tag = 'internal scratch']
  %s0 = inlined_call_operand.vmem [shape: f32[2,4,8,8], index: 0, kind: input, shape index: {}]
  %s1 = inlined_call_operand.vmem [shape: f32[2,4,8,8], index: 1, kind: input, shape index: {}]
  %s2 = inlined_call_operand.vmem [shape: f32[2,4,8,8], index: 2, kind: input, shape index: {}]
  %s3 = inlined_call_operand.vmem [shape: f32[2,8,8], index: 3, kind: input, shape index: {}]
  %s4 = inlined_call_operand.vmem [shape: f32[2,4,8,8], index: 4, kind: output, shape index: {}]
  %s5 = sld [smem:[#allocation0]]
  $region49: #{transformer_forward.48} parent=0
    _
  %s7 = ssub.s32 1, %s5
  %s8 = scalar_select 0, %s7, %s5
  loop: start=0, step=1, limit=4
  $region2: #{transformer_forward.48} parent=0 // loop_pre_header
    _
  $region3: #{transformer_forward.48} parent=0 // loop_header
    %s10 = sphi 0, %s14
    %p11 = scmp.ge.s32.totalorder %s10, 4
    %s20 = sphi 0, %s22
    %s23 = sphi 0, %s20
    %s24 = sphi 0, %s23
    %s40 = sphi 0, %s24
    %s46 = sphi 0, %s48
    %s49 = sphi 0, %s46
    %s50 = sphi 0, %s49
    %s66 = sphi 0, %s50
    %s72 = sphi 0, %s74
    %s75 = sphi 0, %s72
    %s76 = sphi 0, %s75
    %s92 = sphi 0, %s76
    %s98 = sphi 0, %s100
    %s101 = sphi 0, %s98
    %s102 = sphi 0, %s101
    %s118 = sphi 0, %s102
    %s124 = sphi 0, %s126
    %s127 = sphi 0, %s124
    %s128 = sphi 0, %s127
    %s144 = sphi 0, %s128
  $region4: #{transformer_forward.48} parent=0 // loop_header_branch
    %13 = sbr.rel (%p11) target = $region8
  $region5: #{transformer_forward.48} parent=0 // loop_body
    %s15 = ssub.s32 %s10, 1
    %s16 = ssub.s32 %s10, 2
    %s17 = sadd.s32 %s10, 1
    %s18 = ssub.s32 %s10, %s17
    %p19 = scmp.eq.s32.totalorder %s18, 0
    %s21 = sadd.s32 %s20, 1
    %s22 = scalar_select %p19, %s20, %s21
    %p25 = pneg %p19
    %p26 = scmp.eq.s32.totalorder %s10, 1
    %p27 = por %p25, %p26
    %p28 = scmp.ne.s32.totalorder %s20, %s23
    %p29 = scmp.eq.s32.totalorder %s10, 0
    %p30 = por %p28, %p29
    %p31 = scmp.ne.s32.totalorder %s20, %s23
    %p32 = scmp.eq.s32.totalorder %s15, 1
    %p33 = por %p31, %p32
    %p34 = scmp.ne.s32.totalorder %s23, %s24
    %p35 = scmp.eq.s32.totalorder %s15, 0
    %p36 = por %p34, %p35
    %p37 = scmp.ne.s32.totalorder %s23, %s24
    %p38 = scmp.eq.s32.totalorder %s16, 1
    %p39 = por %p37, %p38
    %p41 = scmp.ne.s32.totalorder %s24, %s40
    %p42 = scmp.eq.s32.totalorder %s16, 0
    %p43 = por %p41, %p42
    %s44 = ssub.s32 %s10, %s17
    %p45 = scmp.eq.s32.totalorder %s44, 0
    %s47 = sadd.s32 %s46, 1
    %s48 = scalar_select %p45, %s46, %s47
    %p51 = pneg %p45
    %p52 = scmp.eq.s32.totalorder %s10, 1
    %p53 = por %p51, %p52
    %p54 = scmp.ne.s32.totalorder %s46, %s49
    %p55 = scmp.eq.s32.totalorder %s10, 0
    %p56 = por %p54, %p55
    %p57 = scmp.ne.s32.totalorder %s46, %s49
    %p58 = scmp.eq.s32.totalorder %s15, 1
    %p59 = por %p57, %p58
    %p60 = scmp.ne.s32.totalorder %s49, %s50
    %p61 = scmp.eq.s32.totalorder %s15, 0
    %p62 = por %p60, %p61
    %p63 = scmp.ne.s32.totalorder %s49, %s50
    %p64 = scmp.eq.s32.totalorder %s16, 1
    %p65 = por %p63, %p64
    %p67 = scmp.ne.s32.totalorder %s50, %s66
    %p68 = scmp.eq.s32.totalorder %s16, 0
    %p69 = por %p67, %p68
    %s70 = ssub.s32 %s10, %s17
    %p71 = scmp.eq.s32.totalorder %s70, 0
    %s73 = sadd.s32 %s72, 1
    %s74 = scalar_select %p71, %s72, %s73
    %p77 = pneg %p71
    %p78 = scmp.eq.s32.totalorder %s10, 1
    %p79 = por %p77, %p78
    %p80 = scmp.ne.s32.totalorder %s72, %s75
    %p81 = scmp.eq.s32.totalorder %s10, 0
    %p82 = por %p80, %p81
    %p83 = scmp.ne.s32.totalorder %s72, %s75
    %p84 = scmp.eq.s32.totalorder %s15, 1
    %p85 = por %p83, %p84
    %p86 = scmp.ne.s32.totalorder %s75, %s76
    %p87 = scmp.eq.s32.totalorder %s15, 0
    %p88 = por %p86, %p87
    %p89 = scmp.ne.s32.totalorder %s75, %s76
    %p90 = scmp.eq.s32.totalorder %s16, 1
    %p91 = por %p89, %p90
    %p93 = scmp.ne.s32.totalorder %s76, %s92
    %p94 = scmp.eq.s32.totalorder %s16, 0
    %p95 = por %p93, %p94
    %s96 = ssub.s32 %s10, %s17
    %p97 = scmp.eq.s32.totalorder %s96, 0
    %s99 = sadd.s32 %s98, 1
    %s100 = scalar_select %p97, %s98, %s99
    %p103 = pneg %p97
    %p104 = scmp.eq.s32.totalorder %s10, 1
    %p105 = por %p103, %p104
    %p106 = scmp.ne.s32.totalorder %s98, %s101
    %p107 = scmp.eq.s32.totalorder %s10, 0
    %p108 = por %p106, %p107
    %p109 = scmp.ne.s32.totalorder %s98, %s101
    %p110 = scmp.eq.s32.totalorder %s15, 1
    %p111 = por %p109, %p110
    %p112 = scmp.ne.s32.totalorder %s101, %s102
    %p113 = scmp.eq.s32.totalorder %s15, 0
    %p114 = por %p112, %p113
    %p115 = scmp.ne.s32.totalorder %s101, %s102
    %p116 = scmp.eq.s32.totalorder %s16, 1
    %p117 = por %p115, %p116
    %p119 = scmp.ne.s32.totalorder %s102, %s118
    %p120 = scmp.eq.s32.totalorder %s16, 0
    %p121 = por %p119, %p120
    %s122 = ssub.s32 %s10, %s17
    %p123 = scmp.eq.s32.totalorder %s122, 0
    %s125 = sadd.s32 %s124, 1
    %s126 = scalar_select %p123, %s124, %s125
    %p129 = pneg %p123
    %p130 = scmp.eq.s32.totalorder %s10, 1
    %p131 = por %p129, %p130
    %p132 = scmp.ne.s32.totalorder %s124, %s127
    %p133 = scmp.eq.s32.totalorder %s10, 0
    %p134 = por %p132, %p133
    %p135 = scmp.ne.s32.totalorder %s124, %s127
    %p136 = scmp.eq.s32.totalorder %s15, 1
    %p137 = por %p135, %p136
    %p138 = scmp.ne.s32.totalorder %s127, %s128
    %p139 = scmp.eq.s32.totalorder %s15, 0
    %p140 = por %p138, %p139
    %p141 = scmp.ne.s32.totalorder %s127, %s128
    %p142 = scmp.eq.s32.totalorder %s16, 1
    %p143 = por %p141, %p142
    %p145 = scmp.ne.s32.totalorder %s128, %s144
    %p146 = scmp.eq.s32.totalorder %s16, 0
    %p147 = por %p145, %p146
    %p148 = scmp.le.s32.totalorder 1, %s10
    %p149 = scmp.lt.s32.totalorder %s10, 3
    %p150 = pnand %p148, %p149
    %p151 = pneg %p150
    // Predicated region
    $region9: #{transformer_forward.48} parent=5 // pred_check
      _
    $region10: #{transformer_forward.48} parent=5 // pred_check_branch
      %153 = sbr.rel (%p150) target = $region12
    $region11: #{transformer_forward.48} parent=5 // pred_region
      %s154 = ssub.s32 %s10, 1
    $region12: #{transformer_forward.48} parent=5 // pred_fallthru
      _
    %p155 = scmp.lt.s32.totalorder %s10, 2
    // Predicated region
    $region13: #{transformer_forward.48} parent=5 // pred_check
      %p156 = pneg %p155
    $region14: #{transformer_forward.48} parent=5 // pred_check_branch
      %158 = sbr.rel (%p156) target = $region16
    $region15: #{transformer_forward.48} parent=5 // pred_region
      // Predicated region
      $region17: #{transformer_forward.48} parent=15 // pred_check
        %p159 = pneg %p30
      $region18: #{transformer_forward.48} parent=15 // pred_check_branch
        %161 = sbr.rel (%p159) target = $region20
      $region19: #{transformer_forward.48} parent=15 // pred_region
        %p162 = scmp.lt.s32.totalorder %s10, 1
        %s163 = scalar_select %p162, %s10, 1
        %s164 = smul.addr %s163, 4
        %s165 = smul.addr %s164, 8
        %s166 = scalar_lea.vmem %s0, %s165
      $region20: #{transformer_forward.48} parent=15 // pred_fallthru
        _
      // Predicated region
      $region21: #{transformer_forward.48} parent=15 // pred_check
        %p167 = pneg %p56
      $region22: #{transformer_forward.48} parent=15 // pred_check_branch
        %169 = sbr.rel (%p167) target = $region24
      $region23: #{transformer_forward.48} parent=15 // pred_region
        %p170 = scmp.lt.s32.totalorder %s10, 1
        %s171 = scalar_select %p170, %s10, 1
        %s172 = smul.addr %s171, 4
        %s173 = smul.addr %s172, 8
        %s174 = scalar_lea.vmem %s1, %s173
      $region24: #{transformer_forward.48} parent=15 // pred_fallthru
        _
      // Predicated region
      $region25: #{transformer_forward.48} parent=15 // pred_check
        %p175 = pneg %p82
      $region26: #{transformer_forward.48} parent=15 // pred_check_branch
        %177 = sbr.rel (%p175) target = $region28
      $region27: #{transformer_forward.48} parent=15 // pred_region
        %p178 = scmp.lt.s32.totalorder %s10, 1
        %s179 = scalar_select %p178, %s10, 1
        %s180 = smul.addr %s179, 4
        %s181 = smul.addr %s180, 8
        %s182 = scalar_lea.vmem %s2, %s181
      $region28: #{transformer_forward.48} parent=15 // pred_fallthru
        _
      // Predicated region
      $region29: #{transformer_forward.48} parent=15 // pred_check
        %p183 = pneg %p108
      $region30: #{transformer_forward.48} parent=15 // pred_check_branch
        %185 = sbr.rel (%p183) target = $region32
      $region31: #{transformer_forward.48} parent=15 // pred_region
        %p186 = scmp.lt.s32.totalorder %s10, 1
        %s187 = scalar_select %p186, %s10, 1
        %s188 = smul.addr %s187, 8
        %s189 = scalar_lea.vmem %s3, %s188
      $region32: #{transformer_forward.48} parent=15 // pred_fallthru
        _
    $region16: #{transformer_forward.48} parent=5 // pred_fallthru
      _
    %p190 = scmp.le.s32.totalorder 1, %s10
    %p191 = scmp.lt.s32.totalorder %s10, 3
    %p192 = pnand %p190, %p191
    %p193 = pneg %p192
    // Predicated region
    $region33: #{transformer_forward.48} parent=5 // pred_check
      _
    $region34: #{transformer_forward.48} parent=5 // pred_check_branch
      %195 = sbr.rel (%p192) target = $region36
    $region35: #{transformer_forward.48} parent=5 // pred_region
      %s196 = ssub.s32 %s10, 1
      %p197 = scmp.lt.s32.totalorder %s15, 1
      %s198 = scalar_select %p197, %s15, 1
      %s199 = smul.addr %s198, 4
      %s200 = smul.addr %s199, 8
      %s201 = scalar_lea.vmem %s0, %s200
      %p202 = pneg %p36
      %p203 = pneg %p33
      %p204 = scmp.lt.s32.totalorder %s15, 1
      %s205 = scalar_select %p204, %s15, 1
      %s206 = smul.addr %s205, 4
      %s207 = smul.addr %s206, 8
      %s208 = scalar_lea.vmem %s1, %s207
      %p209 = pneg %p62
      %p210 = pneg %p59
      %p211 = scmp.lt.s32.totalorder %s15, 1
      %s212 = scalar_select %p211, %s15, 1
      %s213 = smul.addr %s212, 4
      %s214 = smul.addr %s213, 8
      %s215 = scalar_lea.vmem %s2, %s214
      %p216 = pneg %p88
      %p217 = pneg %p85
      %p218 = scmp.lt.s32.totalorder %s15, 1
      %s219 = scalar_select %p218, %s15, 1
      %s220 = smul.addr %s219, 8
      %s221 = scalar_lea.vmem %s3, %s220
      %p222 = pneg %p114
      %p223 = pneg %p111
      %p224 = pneg %p140
      %p225 = pneg %p137
      %p226 = scmp.lt.s32.totalorder %s15, 1
      %s227 = scalar_select %p226, %s15, 1
      %s228 = smul.addr %s227, 4
      %s229 = smul.addr %s228, 8
      %s230 = scalar_lea.vmem %s4, %s229
      %p231 = scmp.lt.s32.totalorder %s15, 1
      %s232 = scalar_select %p231, %s15, 1
      %s233 = smul.addr %s232, 4
      %s234 = smul.addr %s233, 8
      %s235 = scalar_lea.vmem %s0, %s234
      %p236 = scmp.lt.s32.totalorder %s15, 1
      %s237 = scalar_select %p236, %s15, 1
      %s238 = smul.addr %s237, 4
      %s239 = smul.addr %s238, 8
      %s240 = scalar_lea.vmem %s1, %s239
      %p241 = scmp.lt.s32.totalorder %s15, 1
      %s242 = scalar_select %p241, %s15, 1
      %s243 = smul.addr %s242, 4
      %s244 = smul.addr %s243, 8
      %s245 = scalar_lea.vmem %s2, %s244
      %p246 = scmp.lt.s32.totalorder %s15, 1
      %s247 = scalar_select %p246, %s15, 1
      %s248 = smul.addr %s247, 8
      %s249 = scalar_lea.vmem %s3, %s248
      %p250 = scmp.lt.s32.totalorder %s15, 1
      %s251 = scalar_select %p250, %s15, 1
      %s252 = smul.addr %s251, 4
      %s253 = smul.addr %s252, 8
      %s254 = scalar_lea.vmem %s4, %s253
      %v256 = vld [vmem:[%s235] sm:$0xff]
      %v257 = vld [vmem:[%s235 + $0x8] sm:$0xff]
      %v258 = vld [vmem:[%s235 + $0x10] sm:$0xff]
      %v259 = vld [vmem:[%s235 + $0x18] sm:$0xff]
      %v260 = vpack.c.bf16 %v256, %v256
      %v261 = vpack.c.bf16 %v257, %v257
      %v262 = vpack.c.bf16 %v258, %v258
      %v263 = vpack.c.bf16 %v259, %v259
      %v264 = vld [vmem:[%s240] sm:$0xff]
      %v265 = vld [vmem:[%s240 + $0x8] sm:$0xff]
      %v266 = vld [vmem:[%s240 + $0x10] sm:$0xff]
      %v267 = vld [vmem:[%s240 + $0x18] sm:$0xff]
      %v268 = vpack.c.bf16 %v264, %v264
      %v269 = vpack.c.bf16 %v265, %v265
      %v270 = vpack.c.bf16 %v266, %v266
      %v271 = vpack.c.bf16 %v267, %v267
      %v272 = vld [vmem:[%s245] sm:$0xff]
      %v273 = vld [vmem:[%s245 + $0x8] sm:$0xff]
      %v274 = vld [vmem:[%s245 + $0x10] sm:$0xff]
      %v275 = vld [vmem:[%s245 + $0x18] sm:$0xff]
      %v276 = vpack.c.bf16 %v272, %v272
      %v277 = vpack.c.bf16 %v273, %v273
      %v278 = vpack.c.bf16 %v274, %v274
      %v279 = vpack.c.bf16 %v275, %v275
      %vm280 = vcmask 64512
      %v282 = vsel %vm280, %v260, 0
      %v285 = vsel %vm280, %v268, 0
      %287 = vmatprep.subr.bf16.mxu0 0
      %288 = vmatpush1.bf16.xpose.msra.mxu0 0
      %289 = vmatprep.subr.bf16.mxu0 0
      %290 = vmatpush1.bf16.xpose.msra.mxu0 0
      %291 = vmatprep.subr.bf16.mxu0 0
      %292 = vmatpush1.bf16.xpose.msra.mxu0 0
      %293 = vmatprep.subr.bf16.mxu0 0
      %294 = vmatpush1.bf16.xpose.msra.mxu0 0
      %295 = vmatprep.subr.bf16.mxu0 0
      %296 = vmatpush1.bf16.xpose.msra.mxu0 0
      %297 = vmatprep.subr.bf16.mxu0 0
      %298 = vmatpush1.bf16.xpose.msra.mxu0 0
      %299 = vmatprep.subr.bf16.mxu0 0
      %300 = vmatpush1.bf16.xpose.msra.mxu0 0
      %301 = vmatprep.subr.bf16.mxu0 0
      %302 = vmatpush1.bf16.xpose.msra.mxu0 %v285
      %303 = vmatprep.subr.bf16.mxu0 0
      %304 = vmatpush2.bf16.xpose.msra.mxu0 0
      %305 = vmatprep.subr.bf16.mxu0 0
      %306 = vmatpush2.bf16.xpose.msra.mxu0 0
      %307 = vmatprep.subr.bf16.mxu0 0
      %308 = vmatpush2.bf16.xpose.msra.mxu0 0
      %309 = vmatprep.subr.bf16.mxu0 0
      %310 = vmatpush2.bf16.xpose.msra.mxu0 0
      %311 = vmatprep.subr.bf16.mxu0 0
      %312 = vmatpush2.bf16.xpose.msra.mxu0 0
      %313 = vmatprep.subr.bf16.mxu0 0
      %314 = vmatpush2.bf16.xpose.msra.mxu0 0
      %315 = vmatprep.subr.bf16.mxu0 0
      %316 = vmatpush2.bf16.xpose.msra.mxu0 0
      %317 = vmatprep.subr.bf16.mxu0 0
      %318 = vmatpush2.bf16.xpose.msra.mxu0 0
      %319 = vmatprep.mubr.bf16.mxu0 0
      %320 = vmatmul.mubr.bf16.gmra.mxu0 %v282
      %v321 = vpop.f32.mrf.mxu0
      %v322 = vadd.f32 0.0, %v321
      %v323 = vpop.f32.mrf.mxu0
      %v324 = vpop.f32.mrf.mxu0
      %v325 = vpop.f32.mrf.mxu0
      %326 = vdwg.mxu0
      %v328 = vsel %vm280, %v261, 0
      %v331 = vsel %vm280, %v269, 0
      %333 = vmatprep.subr.bf16.mxu0 0
      %334 = vmatpush1.bf16.xpose.msra.mxu0 0
      %335 = vmatprep.subr.bf16.mxu0 0
      %336 = vmatpush1.bf16.xpose.msra.mxu0 0
      %337 = vmatprep.subr.bf16.mxu0 0
      %338 = vmatpush1.bf16.xpose.msra.mxu0 0
      %339 = vmatprep.subr.bf16.mxu0 0
      %340 = vmatpush1.bf16.xpose.msra.mxu0 0
      %341 = vmatprep.subr.bf16.mxu0 0
      %342 = vmatpush1.bf16.xpose.msra.mxu0 0
      %343 = vmatprep.subr.bf16.mxu0 0
      %344 = vmatpush1.bf16.xpose.msra.mxu0 0
      %345 = vmatprep.subr.bf16.mxu0 0
      %346 = vmatpush1.bf16.xpose.msra.mxu0 0
      %347 = vmatprep.subr.bf16.mxu0 0
      %348 = vmatpush1.bf16.xpose.msra.mxu0 %v331
      %349 = vmatprep.subr.bf16.mxu0 0
      %350 = vmatpush2.bf16.xpose.msra.mxu0 0
      %351 = vmatprep.subr.bf16.mxu0 0
      %352 = vmatpush2.bf16.xpose.msra.mxu0 0
      %353 = vmatprep.subr.bf16.mxu0 0
      %354 = vmatpush2.bf16.xpose.msra.mxu0 0
      %355 = vmatprep.subr.bf16.mxu0 0
      %356 = vmatpush2.bf16.xpose.msra.mxu0 0
      %357 = vmatprep.subr.bf16.mxu0 0
      %358 = vmatpush2.bf16.xpose.msra.mxu0 0
      %359 = vmatprep.subr.bf16.mxu0 0
      %360 = vmatpush2.bf16.xpose.msra.mxu0 0
      %361 = vmatprep.subr.bf16.mxu0 0
      %362 = vmatpush2.bf16.xpose.msra.mxu0 0
      %363 = vmatprep.subr.bf16.mxu0 0
      %364 = vmatpush2.bf16.xpose.msra.mxu0 0
      %365 = vmatprep.mubr.bf16.mxu0 0
      %366 = vmatmul.mubr.bf16.gmra.mxu0 %v328
      %v367 = vpop.f32.mrf.mxu0
      %v368 = vadd.f32 0.0, %v367
      %v369 = vpop.f32.mrf.mxu0
      %v370 = vpop.f32.mrf.mxu0
      %v371 = vpop.f32.mrf.mxu0
      %372 = vdwg.mxu0
      %v374 = vsel %vm280, %v262, 0
      %v377 = vsel %vm280, %v270, 0
      %379 = vmatprep.subr.bf16.mxu0 0
      %380 = vmatpush1.bf16.xpose.msra.mxu0 0
      %381 = vmatprep.subr.bf16.mxu0 0
      %382 = vmatpush1.bf16.xpose.msra.mxu0 0
      %383 = vmatprep.subr.bf16.mxu0 0
      %384 = vmatpush1.bf16.xpose.msra.mxu0 0
      %385 = vmatprep.subr.bf16.mxu0 0
      %386 = vmatpush1.bf16.xpose.msra.mxu0 0
      %387 = vmatprep.subr.bf16.mxu0 0
      %388 = vmatpush1.bf16.xpose.msra.mxu0 0
      %389 = vmatprep.subr.bf16.mxu0 0
      %390 = vmatpush1.bf16.xpose.msra.mxu0 0
      %391 = vmatprep.subr.bf16.mxu0 0
      %392 = vmatpush1.bf16.xpose.msra.mxu0 0
      %393 = vmatprep.subr.bf16.mxu0 0
      %394 = vmatpush1.bf16.xpose.msra.mxu0 %v377
      %395 = vmatprep.subr.bf16.mxu0 0
      %396 = vmatpush2.bf16.xpose.msra.mxu0 0
      %397 = vmatprep.subr.bf16.mxu0 0
      %398 = vmatpush2.bf16.xpose.msra.mxu0 0
      %399 = vmatprep.subr.bf16.mxu0 0
      %400 = vmatpush2.bf16.xpose.msra.mxu0 0
      %401 = vmatprep.subr.bf16.mxu0 0
      %402 = vmatpush2.bf16.xpose.msra.mxu0 0
      %403 = vmatprep.subr.bf16.mxu0 0
      %404 = vmatpush2.bf16.xpose.msra.mxu0 0
      %405 = vmatprep.subr.bf16.mxu0 0
      %406 = vmatpush2.bf16.xpose.msra.mxu0 0
      %407 = vmatprep.subr.bf16.mxu0 0
      %408 = vmatpush2.bf16.xpose.msra.mxu0 0
      %409 = vmatprep.subr.bf16.mxu0 0
      %410 = vmatpush2.bf16.xpose.msra.mxu0 0
      %411 = vmatprep.mubr.bf16.mxu0 0
      %412 = vmatmul.mubr.bf16.gmra.mxu0 %v374
      %v413 = vpop.f32.mrf.mxu0
      %v414 = vadd.f32 0.0, %v413
      %v415 = vpop.f32.mrf.mxu0
      %v416 = vpop.f32.mrf.mxu0
      %v417 = vpop.f32.mrf.mxu0
      %418 = vdwg.mxu0
      %v420 = vsel %vm280, %v263, 0
      %v423 = vsel %vm280, %v271, 0
      %425 = vmatprep.subr.bf16.mxu0 0
      %426 = vmatpush1.bf16.xpose.msra.mxu0 0
      %427 = vmatprep.subr.bf16.mxu0 0
      %428 = vmatpush1.bf16.xpose.msra.mxu0 0
      %429 = vmatprep.subr.bf16.mxu0 0
      %430 = vmatpush1.bf16.xpose.msra.mxu0 0
      %431 = vmatprep.subr.bf16.mxu0 0
      %432 = vmatpush1.bf16.xpose.msra.mxu0 0
      %433 = vmatprep.subr.bf16.mxu0 0
      %434 = vmatpush1.bf16.xpose.msra.mxu0 0
      %435 = vmatprep.subr.bf16.mxu0 0
      %436 = vmatpush1.bf16.xpose.msra.mxu0 0
      %437 = vmatprep.subr.bf16.mxu0 0
      %438 = vmatpush1.bf16.xpose.msra.mxu0 0
      %439 = vmatprep.subr.bf16.mxu0 0
      %440 = vmatpush1.bf16.xpose.msra.mxu0 %v423
      %441 = vmatprep.subr.bf16.mxu0 0
      %442 = vmatpush2.bf16.xpose.msra.mxu0 0
      %443 = vmatprep.subr.bf16.mxu0 0
      %444 = vmatpush2.bf16.xpose.msra.mxu0 0
      %445 = vmatprep.subr.bf16.mxu0 0
      %446 = vmatpush2.bf16.xpose.msra.mxu0 0
      %447 = vmatprep.subr.bf16.mxu0 0
      %448 = vmatpush2.bf16.xpose.msra.mxu0 0
      %449 = vmatprep.subr.bf16.mxu0 0
      %450 = vmatpush2.bf16.xpose.msra.mxu0 0
      %451 = vmatprep.subr.bf16.mxu0 0
      %452 = vmatpush2.bf16.xpose.msra.mxu0 0
      %453 = vmatprep.subr.bf16.mxu0 0
      %454 = vmatpush2.bf16.xpose.msra.mxu0 0
      %455 = vmatprep.subr.bf16.mxu0 0
      %456 = vmatpush2.bf16.xpose.msra.mxu0 0
      %457 = vmatprep.mubr.bf16.mxu0 0
      %458 = vmatmul.mubr.bf16.gmra.mxu0 %v420
      %v459 = vpop.f32.mrf.mxu0
      %v460 = vadd.f32 0.0, %v459
      %v461 = vpop.f32.mrf.mxu0
      %v462 = vpop.f32.mrf.mxu0
      %v463 = vpop.f32.mrf.mxu0
      %464 = vdwg.mxu0
      %v465 = vmul.f32 %v322, 0.35355338
      %v466 = vmul.f32 %v368, 0.35355338
      %v467 = vmul.f32 %v414, 0.35355338
      %v468 = vmul.f32 %v460, 0.35355338
      %v469 = vld [vmem:[%s249] sm:$0xff]
      %vm470 = vcmp.eq.f32.partialorder %v469, 0.0
      %v471 = vsel %vm470, 1, 0
      %vm472 = vcmp.eq.s32.totalorder %v471, 1
      %v473 = vsel %vm472, -1e+09, %v465
      %v474 = vsel %vm472, -1e+09, %v466
      %v475 = vsel %vm472, -1e+09, %v467
      %v476 = vsel %vm472, -1e+09, %v468
      %v477 = vsel %vm280, %v473, -inf
      %478 = vmax.xlane.f32.xlu0 %v477
      %v479 = vpop.xlane.xlu0 %478
      %v480 = vsel %vm280, %v474, -inf
      %481 = vmax.xlane.f32.xlu0 %v480
      %v482 = vpop.xlane.xlu0 %481
      %v483 = vsel %vm280, %v475, -inf
      %484 = vmax.xlane.f32.xlu0 %v483
      %v485 = vpop.xlane.xlu0 %484
      %v486 = vsel %vm280, %v476, -inf
      %487 = vmax.xlane.f32.xlu0 %v486
      %v488 = vpop.xlane.xlu0 %487
      %v489 = vsub.f32 %v473, %v479
      %v490 = vsub.f32 %v474, %v482
      %v491 = vsub.f32 %v475, %v485
      %v492 = vsub.f32 %v476, %v488
      %v493 = vmul.f32 %v489, 1.442695
      %v494 = vpow.pop %v493
      %v495 = vmul.f32 %v490, 1.442695
      %v496 = vpow.pop %v495
      %v497 = vmul.f32 %v491, 1.442695
      %v498 = vpow.pop %v497
      %v499 = vmul.f32 %v492, 1.442695
      %v500 = vpow.pop %v499
      %v501 = vsel %vm280, %v494, 0.0
      %502 = vadd.xlane.f32.xlu0 %v501
      %v503 = vpop.xlane.xlu0 %502
      %v504 = vsel %vm280, %v496, 0.0
      %505 = vadd.xlane.f32.xlu0 %v504
      %v506 = vpop.xlane.xlu0 %505
      %v507 = vsel %vm280, %v498, 0.0
      %508 = vadd.xlane.f32.xlu0 %v507
      %v509 = vpop.xlane.xlu0 %508
      %v510 = vsel %vm280, %v500, 0.0
      %511 = vadd.xlane.f32.xlu0 %v510
      %v512 = vpop.xlane.xlu0 %511
      %v513 = vrcp.pop %v503
      %v514 = vrcp.pop %v506
      %v515 = vrcp.pop %v509
      %v516 = vrcp.pop %v512
      %v517 = vmul.f32 %v494, %v513
      %v518 = vmul.f32 %v496, %v514
      %v519 = vmul.f32 %v498, %v515
      %v520 = vmul.f32 %v500, %v516
      %v521 = vpack.c.bf16 %v517, %v517
      %v522 = vpack.c.bf16 %v518, %v518
      %v523 = vpack.c.bf16 %v519, %v519
      %v524 = vpack.c.bf16 %v520, %v520
      %v526 = vsel %vm280, %v521, 0
      %vm528 = vcmask 1043456
      %v530 = vsel %vm528, %v276, 0
      %532 = vmatprep.subr.bf16.mxu0 0
      %533 = vmatpush1.bf16.msra.mxu0 0
      %534 = vmatprep.subr.bf16.mxu0 0
      %535 = vmatpush1.bf16.msra.mxu0 0
      %536 = vmatprep.subr.bf16.mxu0 0
      %537 = vmatpush1.bf16.msra.mxu0 0
      %538 = vmatprep.subr.bf16.mxu0 0
      %539 = vmatpush1.bf16.msra.mxu0 0
      %540 = vmatprep.subr.bf16.mxu0 0
      %541 = vmatpush1.bf16.msra.mxu0 0
      %542 = vmatprep.subr.bf16.mxu0 0
      %543 = vmatpush1.bf16.msra.mxu0 0
      %544 = vmatprep.subr.bf16.mxu0 0
      %545 = vmatpush1.bf16.msra.mxu0 0
      %546 = vmatprep.subr.bf16.mxu0 0
      %547 = vmatpush1.bf16.msra.mxu0 %v530
      %548 = vmatprep.subr.bf16.mxu0 0
      %549 = vmatpush2.bf16.msra.mxu0 0
      %550 = vmatprep.subr.bf16.mxu0 0
      %551 = vmatpush2.bf16.msra.mxu0 0
      %552 = vmatprep.subr.bf16.mxu0 0
      %553 = vmatpush2.bf16.msra.mxu0 0
      %554 = vmatprep.subr.bf16.mxu0 0
      %555 = vmatpush2.bf16.msra.mxu0 0
      %556 = vmatprep.subr.bf16.mxu0 0
      %557 = vmatpush2.bf16.msra.mxu0 0
      %558 = vmatprep.subr.bf16.mxu0 0
      %559 = vmatpush2.bf16.msra.mxu0 0
      %560 = vmatprep.subr.bf16.mxu0 0
      %561 = vmatpush2.bf16.msra.mxu0 0
      %562 = vmatprep.subr.bf16.mxu0 0
      %563 = vmatpush2.bf16.msra.mxu0 0
      %564 = vmatprep.mubr.bf16.mxu0 0
      %565 = vmatmul.mubr.bf16.gmra.mxu0 %v526
      %v566 = vpop.f32.mrf.mxu0
      %v567 = vadd.f32 0.0, %v566
      %v568 = vpop.f32.mrf.mxu0
      %v569 = vpop.f32.mrf.mxu0
      %v570 = vpop.f32.mrf.mxu0
      %571 = vdwg.mxu0
      %v573 = vsel %vm280, %v522, 0
      %v576 = vsel %vm528, %v277, 0
      %578 = vmatprep.subr.bf16.mxu0 0
      %579 = vmatpush1.bf16.msra.mxu0 0
      %580 = vmatprep.subr.bf16.mxu0 0
      %581 = vmatpush1.bf16.msra.mxu0 0
      %582 = vmatprep.subr.bf16.mxu0 0
      %583 = vmatpush1.bf16.msra.mxu0 0
      %584 = vmatprep.subr.bf16.mxu0 0
      %585 = vmatpush1.bf16.msra.mxu0 0
      %586 = vmatprep.subr.bf16.mxu0 0
      %587 = vmatpush1.bf16.msra.mxu0 0
      %588 = vmatprep.subr.bf16.mxu0 0
      %589 = vmatpush1.bf16.msra.mxu0 0
      %590 = vmatprep.subr.bf16.mxu0 0
      %591 = vmatpush1.bf16.msra.mxu0 0
      %592 = vmatprep.subr.bf16.mxu0 0
      %593 = vmatpush1.bf16.msra.mxu0 %v576
      %594 = vmatprep.subr.bf16.mxu0 0
      %595 = vmatpush2.bf16.msra.mxu0 0
      %596 = vmatprep.subr.bf16.mxu0 0
      %597 = vmatpush2.bf16.msra.mxu0 0
      %598 = vmatprep.subr.bf16.mxu0 0
      %599 = vmatpush2.bf16.msra.mxu0 0
      %600 = vmatprep.subr.bf16.mxu0 0
      %601 = vmatpush2.bf16.msra.mxu0 0
      %602 = vmatprep.subr.bf16.mxu0 0
      %603 = vmatpush2.bf16.msra.mxu0 0
      %604 = vmatprep.subr.bf16.mxu0 0
      %605 = vmatpush2.bf16.msra.mxu0 0
      %606 = vmatprep.subr.bf16.mxu0 0
      %607 = vmatpush2.bf16.msra.mxu0 0
      %608 = vmatprep.subr.bf16.mxu0 0
      %609 = vmatpush2.bf16.msra.mxu0 0
      %610 = vmatprep.mubr.bf16.mxu0 0
      %611 = vmatmul.mubr.bf16.gmra.mxu0 %v573
      %v612 = vpop.f32.mrf.mxu0
      %v613 = vadd.f32 0.0, %v612
      %v614 = vpop.f32.mrf.mxu0
      %v615 = vpop.f32.mrf.mxu0
      %v616 = vpop.f32.mrf.mxu0
      %617 = vdwg.mxu0
      %v619 = vsel %vm280, %v523, 0
      %v622 = vsel %vm528, %v278, 0
      %624 = vmatprep.subr.bf16.mxu0 0
      %625 = vmatpush1.bf16.msra.mxu0 0
      %626 = vmatprep.subr.bf16.mxu0 0
      %627 = vmatpush1.bf16.msra.mxu0 0
      %628 = vmatprep.subr.bf16.mxu0 0
      %629 = vmatpush1.bf16.msra.mxu0 0
      %630 = vmatprep.subr.bf16.mxu0 0
      %631 = vmatpush1.bf16.msra.mxu0 0
      %632 = vmatprep.subr.bf16.mxu0 0
      %633 = vmatpush1.bf16.msra.mxu0 0
      %634 = vmatprep.subr.bf16.mxu0 0
      %635 = vmatpush1.bf16.msra.mxu0 0
      %636 = vmatprep.subr.bf16.mxu0 0
      %637 = vmatpush1.bf16.msra.mxu0 0
      %638 = vmatprep.subr.bf16.mxu0 0
      %639 = vmatpush1.bf16.msra.mxu0 %v622
      %640 = vmatprep.subr.bf16.mxu0 0
      %641 = vmatpush2.bf16.msra.mxu0 0
      %642 = vmatprep.subr.bf16.mxu0 0
      %643 = vmatpush2.bf16.msra.mxu0 0
      %644 = vmatprep.subr.bf16.mxu0 0
      %645 = vmatpush2.bf16.msra.mxu0 0
      %646 = vmatprep.subr.bf16.mxu0 0
      %647 = vmatpush2.bf16.msra.mxu0 0
      %648 = vmatprep.subr.bf16.mxu0 0
      %649 = vmatpush2.bf16.msra.mxu0 0
      %650 = vmatprep.subr.bf16.mxu0 0
      %651 = vmatpush2.bf16.msra.mxu0 0
      %652 = vmatprep.subr.bf16.mxu0 0
      %653 = vmatpush2.bf16.msra.mxu0 0
      %654 = vmatprep.subr.bf16.mxu0 0
      %655 = vmatpush2.bf16.msra.mxu0 0
      %656 = vmatprep.mubr.bf16.mxu0 0
      %657 = vmatmul.mubr.bf16.gmra.mxu0 %v619
      %v658 = vpop.f32.mrf.mxu0
      %v659 = vadd.f32 0.0, %v658
      %v660 = vpop.f32.mrf.mxu0
      %v661 = vpop.f32.mrf.mxu0
      %v662 = vpop.f32.mrf.mxu0
      %663 = vdwg.mxu0
      %v665 = vsel %vm280, %v524, 0
      %v668 = vsel %vm528, %v279, 0
      %670 = vmatprep.subr.bf16.mxu0 0
      %671 = vmatpush1.bf16.msra.mxu0 0
      %672 = vmatprep.subr.bf16.mxu0 0
      %673 = vmatpush1.bf16.msra.mxu0 0
      %674 = vmatprep.subr.bf16.mxu0 0
      %675 = vmatpush1.bf16.msra.mxu0 0
      %676 = vmatprep.subr.bf16.mxu0 0
      %677 = vmatpush1.bf16.msra.mxu0 0
      %678 = vmatprep.subr.bf16.mxu0 0
      %679 = vmatpush1.bf16.msra.mxu0 0
      %680 = vmatprep.subr.bf16.mxu0 0
      %681 = vmatpush1.bf16.msra.mxu0 0
      %682 = vmatprep.subr.bf16.mxu0 0
      %683 = vmatpush1.bf16.msra.mxu0 0
      %684 = vmatprep.subr.bf16.mxu0 0
      %685 = vmatpush1.bf16.msra.mxu0 %v668
      %686 = vmatprep.subr.bf16.mxu0 0
      %687 = vmatpush2.bf16.msra.mxu0 0
      %688 = vmatprep.subr.bf16.mxu0 0
      %689 = vmatpush2.bf16.msra.mxu0 0
      %690 = vmatprep.subr.bf16.mxu0 0
      %691 = vmatpush2.bf16.msra.mxu0 0
      %692 = vmatprep.subr.bf16.mxu0 0
      %693 = vmatpush2.bf16.msra.mxu0 0
      %694 = vmatprep.subr.bf16.mxu0 0
      %695 = vmatpush2.bf16.msra.mxu0 0
      %696 = vmatprep.subr.bf16.mxu0 0
      %697 = vmatpush2.bf16.msra.mxu0 0
      %698 = vmatprep.subr.bf16.mxu0 0
      %699 = vmatpush2.bf16.msra.mxu0 0
      %700 = vmatprep.subr.bf16.mxu0 0
      %701 = vmatpush2.bf16.msra.mxu0 0
      %702 = vmatprep.mubr.bf16.mxu0 0
      %703 = vmatmul.mubr.bf16.gmra.mxu0 %v665
      %v704 = vpop.f32.mrf.mxu0
      %v705 = vadd.f32 0.0, %v704
      %v706 = vpop.f32.mrf.mxu0
      %v707 = vpop.f32.mrf.mxu0
      %v708 = vpop.f32.mrf.mxu0
      %709 = vdwg.mxu0
      %710 = vst.msk [vmem:[%s254] sm:$0xff] %vm280, %v567
      %711 = vst.msk [vmem:[%s254 + $0x8] sm:$0xff] %vm280, %v613
      %712 = vst.msk [vmem:[%s254 + $0x10] sm:$0xff] %vm280, %v659
      %713 = vst.msk [vmem:[%s254 + $0x18] sm:$0xff] %vm280, %v705
      %p714 = scmp.lt.s32.totalorder %s15, 1
      %s715 = scalar_select %p714, %s15, 1
      %s716 = smul.addr %s715, 4
      %s717 = smul.addr %s716, 8
      %s718 = scalar_lea.vmem %s4, %s717
      // Predicated region
      $region37: #{transformer_forward.48} parent=35 // pred_check
        %p719 = pneg %p137
      $region38: #{transformer_forward.48} parent=35 // pred_check_branch
        %721 = sbr.rel (%p719) target = $region40
      $region39: #{transformer_forward.48} parent=35 // pred_region
        _
      $region40: #{transformer_forward.48} parent=35 // pred_fallthru
        _
    $region36: #{transformer_forward.48} parent=5 // pred_fallthru
      _
    %p722 = scmp.le.s32.totalorder 2, %s10
    // Predicated region
    $region41: #{transformer_forward.48} parent=5 // pred_check
      %p723 = pneg %p722
    $region42: #{transformer_forward.48} parent=5 // pred_check_branch
      %725 = sbr.rel (%p723) target = $region44
    $region43: #{transformer_forward.48} parent=5 // pred_region
      %s726 = ssub.s32 %s10, 2
      // Predicated region
      $region45: #{transformer_forward.48} parent=43 // pred_check
        %p727 = pneg %p143
      $region46: #{transformer_forward.48} parent=43 // pred_check_branch
        %729 = sbr.rel (%p727) target = $region48
      $region47: #{transformer_forward.48} parent=43 // pred_region
        %p730 = scmp.lt.s32.totalorder %s16, 1
        %s731 = scalar_select %p730, %s16, 1
        %s732 = smul.addr %s731, 4
        %s733 = smul.addr %s732, 8
        %s734 = scalar_lea.vmem %s4, %s733
      $region48: #{transformer_forward.48} parent=43 // pred_fallthru
        _
    $region44: #{transformer_forward.48} parent=5 // pred_fallthru
      _
  $region6: #{transformer_forward.48} parent=0 // loop_footer
    %s14 = sadd.s32 1, %s10
  $region7: #{transformer_forward.48} parent=0 // loop_footer_branch
    %9 = sbr.rel target = $region3
  $region8: #{transformer_forward.48} parent=0 // loop_exit
    _

// kernel: transformer_forward.50
$region0: #{transformer_forward.50}
  #allocation0 [shape = 'u32[]', space=smem, size = 0x4, offset = 0x4, fixed_abs, tag = 'smem constant byte address 0x4 - core index']
  #allocation1 [shape = 'u32[144,128]{1,0:T(1,128)}', space=vmem, size = 0x12000, scoped, tag = 'internal scratch']
  %s0 = inlined_call_operand.vmem [shape: f32[16,32], index: 0, kind: input, shape index: {}]
  %s1 = inlined_call_operand.vmem [shape: f32[16,32], index: 1, kind: input, shape index: {}]
  %s2 = inlined_call_operand.vmem [shape: f32[1,32], index: 2, kind: input, shape index: {}]
  %s3 = inlined_call_operand.vmem [shape: f32[1,32], index: 3, kind: input, shape index: {}]
  %s4 = inlined_call_operand.vmem [shape: f32[16,32], index: 4, kind: output, shape index: {}]
  %s5 = sld [smem:[#allocation0]]
  $region26: #{transformer_forward.50} parent=0
    _
  %s7 = ssub.s32 1, %s5
  %s8 = scalar_select 0, %s7, %s5
  // Predicated region
  $region2: #{transformer_forward.50} parent=0 // pred_check
    _
  $region3: #{transformer_forward.50} parent=0 // pred_check_branch
    %10 = sbr.rel (0) target = $region5
  $region4: #{transformer_forward.50} parent=0 // pred_region
    _
  $region5: #{transformer_forward.50} parent=0 // pred_fallthru
    _
  // Predicated region
  $region6: #{transformer_forward.50} parent=0 // pred_check
    _
  $region7: #{transformer_forward.50} parent=0 // pred_check_branch
    %12 = sbr.rel (0) target = $region9
  $region8: #{transformer_forward.50} parent=0 // pred_region
    _
  $region9: #{transformer_forward.50} parent=0 // pred_fallthru
    _
  // Predicated region
  $region10: #{transformer_forward.50} parent=0 // pred_check
    _
  $region11: #{transformer_forward.50} parent=0 // pred_check_branch
    %14 = sbr.rel (0) target = $region13
  $region12: #{transformer_forward.50} parent=0 // pred_region
    _
  $region13: #{transformer_forward.50} parent=0 // pred_fallthru
    _
  // Predicated region
  $region14: #{transformer_forward.50} parent=0 // pred_check
    _
  $region15: #{transformer_forward.50} parent=0 // pred_check_branch
    %16 = sbr.rel (0) target = $region17
  $region16: #{transformer_forward.50} parent=0 // pred_region
    _
  $region17: #{transformer_forward.50} parent=0 // pred_fallthru
    _
  %v17 = vld [vmem:[%s0] sm:$0xff]
  %v18 = vld [vmem:[%s0 + $0x8] sm:$0xff]
  %v19 = vld [vmem:[%s1] sm:$0xff]
  %v20 = vld [vmem:[%s1 + $0x8] sm:$0xff]
  %v21 = vadd.f32 %v17, %v19
  %v22 = vadd.f32 %v18, %v20
  %vm23 = vcmask 261120
  %v24 = vsel %vm23, %v21, 0.0
  %25 = vadd.xlane.f32.xlu0 %v24
  %v26 = vpop.xlane.xlu0 %25
  %v27 = vsel %vm23, %v22, 0.0
  %28 = vadd.xlane.f32.xlu0 %v27
  %v29 = vpop.xlane.xlu0 %28
  %v30 = vrcp.pop 32.0
  %v31 = vmul.f32 %v26, %v30
  %v32 = vmul.f32 %v29, %v30
  %v33 = vsub.f32 %v21, %v31
  %v34 = vsub.f32 %v22, %v32
  %v35 = vmul.f32 %v33, %v33
  %v36 = vmul.f32 %v34, %v34
  %v37 = vsel %vm23, %v35, 0.0
  %38 = vadd.xlane.f32.xlu0 %v37
  %v39 = vpop.xlane.xlu0 %38
  %v40 = vsel %vm23, %v36, 0.0
  %41 = vadd.xlane.f32.xlu0 %v40
  %v42 = vpop.xlane.xlu0 %41
  %v43 = vmul.f32 %v39, %v30
  %v44 = vmul.f32 %v42, %v30
  %v45 = vadd.f32 %v43, 1e-05
  %v46 = vadd.f32 %v44, 1e-05
  %v47 = vrsqrt.pop %v45
  %v48 = vrsqrt.pop %v46
  %v49 = vmul.f32 %v33, %v47
  %v50 = vmul.f32 %v34, %v48
  %v51 = vld [vmem:[%s2] sm:$0x1]
  %v53 = vlaneseq
  %v54 = vshrl.u32 %v53, 7
  %v55 = vsub.s32 0, %v54
  %v56 = vrot.slane %v51, %v55
  %v58 = vmul.f32 %v49, %v56
  %v59 = vmul.f32 %v50, %v56
  %v60 = vld [vmem:[%s3] sm:$0x1]
  %v62 = vlaneseq
  %v63 = vshrl.u32 %v62, 7
  %v64 = vsub.s32 0, %v63
  %v65 = vrot.slane %v60, %v64
  %v67 = vadd.f32 %v58, %v65
  %v68 = vadd.f32 %v59, %v65
  %69 = vst.msk [vmem:[%s4] sm:$0xff] %vm23, %v67
  %70 = vst.msk [vmem:[%s4 + $0x8] sm:$0xff] %vm23, %v68
  // Predicated region
  $region18: #{transformer_forward.50} parent=0 // pred_check
    _
  $region19: #{transformer_forward.50} parent=0 // pred_check_branch
    %72 = sbr.rel (0) target = $region21
  $region20: #{transformer_forward.50} parent=0 // pred_region
    _
  $region21: #{transformer_forward.50} parent=0 // pred_fallthru
    _
  // Predicated region
  $region22: #{transformer_forward.50} parent=0 // pred_check
    _
  $region23: #{transformer_forward.50} parent=0 // pred_check_branch
    %74 = sbr.rel (0) target = $region25
  $region24: #{transformer_forward.50} parent=0 // pred_region
    _
  $region25: #{transformer_forward.50} parent=0 // pred_fallthru
    _

// kernel: transformer_forward.36
$region0: #{transformer_forward.36}
  #allocation0 [shape = 'u32[]', space=smem, size = 0x4, offset = 0x4, fixed_abs, tag = 'smem constant byte address 0x4 - core index']
  #allocation1 [shape = 'u32[144,128]{1,0:T(1,128)}', space=vmem, size = 0x12000, scoped, tag = 'internal scratch']
  %s0 = inlined_call_operand.vmem [shape: f32[2,4,8,8], index: 0, kind: input, shape index: {}]
  %s1 = inlined_call_operand.vmem [shape: f32[2,4,8,8], index: 1, kind: input, shape index: {}]
  %s2 = inlined_call_operand.vmem [shape: f32[2,4,8,8], index: 2, kind: input, shape index: {}]
  %s3 = inlined_call_operand.vmem [shape: f32[2,1,8], index: 3, kind: input, shape index: {}]
  %s4 = inlined_call_operand.vmem [shape: f32[2,4,8,8], index: 4, kind: output, shape index: {}]
  %s5 = sld [smem:[#allocation0]]
  $region49: #{transformer_forward.36} parent=0
    _
  %s7 = ssub.s32 1, %s5
  %s8 = scalar_select 0, %s7, %s5
  loop: start=0, step=1, limit=4
  $region2: #{transformer_forward.36} parent=0 // loop_pre_header
    _
  $region3: #{transformer_forward.36} parent=0 // loop_header
    %s10 = sphi 0, %s14
    %p11 = scmp.ge.s32.totalorder %s10, 4
    %s20 = sphi 0, %s22
    %s23 = sphi 0, %s20
    %s24 = sphi 0, %s23
    %s40 = sphi 0, %s24
    %s46 = sphi 0, %s48
    %s49 = sphi 0, %s46
    %s50 = sphi 0, %s49
    %s66 = sphi 0, %s50
    %s72 = sphi 0, %s74
    %s75 = sphi 0, %s72
    %s76 = sphi 0, %s75
    %s92 = sphi 0, %s76
    %s98 = sphi 0, %s100
    %s101 = sphi 0, %s98
    %s102 = sphi 0, %s101
    %s118 = sphi 0, %s102
    %s124 = sphi 0, %s126
    %s127 = sphi 0, %s124
    %s128 = sphi 0, %s127
    %s144 = sphi 0, %s128
  $region4: #{transformer_forward.36} parent=0 // loop_header_branch
    %13 = sbr.rel (%p11) target = $region8
  $region5: #{transformer_forward.36} parent=0 // loop_body
    %s15 = ssub.s32 %s10, 1
    %s16 = ssub.s32 %s10, 2
    %s17 = sadd.s32 %s10, 1
    %s18 = ssub.s32 %s10, %s17
    %p19 = scmp.eq.s32.totalorder %s18, 0
    %s21 = sadd.s32 %s20, 1
    %s22 = scalar_select %p19, %s20, %s21
    %p25 = pneg %p19
    %p26 = scmp.eq.s32.totalorder %s10, 1
    %p27 = por %p25, %p26
    %p28 = scmp.ne.s32.totalorder %s20, %s23
    %p29 = scmp.eq.s32.totalorder %s10, 0
    %p30 = por %p28, %p29
    %p31 = scmp.ne.s32.totalorder %s20, %s23
    %p32 = scmp.eq.s32.totalorder %s15, 1
    %p33 = por %p31, %p32
    %p34 = scmp.ne.s32.totalorder %s23, %s24
    %p35 = scmp.eq.s32.totalorder %s15, 0
    %p36 = por %p34, %p35
    %p37 = scmp.ne.s32.totalorder %s23, %s24
    %p38 = scmp.eq.s32.totalorder %s16, 1
    %p39 = por %p37, %p38
    %p41 = scmp.ne.s32.totalorder %s24, %s40
    %p42 = scmp.eq.s32.totalorder %s16, 0
    %p43 = por %p41, %p42
    %s44 = ssub.s32 %s10, %s17
    %p45 = scmp.eq.s32.totalorder %s44, 0
    %s47 = sadd.s32 %s46, 1
    %s48 = scalar_select %p45, %s46, %s47
    %p51 = pneg %p45
    %p52 = scmp.eq.s32.totalorder %s10, 1
    %p53 = por %p51, %p52
    %p54 = scmp.ne.s32.totalorder %s46, %s49
    %p55 = scmp.eq.s32.totalorder %s10, 0
    %p56 = por %p54, %p55
    %p57 = scmp.ne.s32.totalorder %s46, %s49
    %p58 = scmp.eq.s32.totalorder %s15, 1
    %p59 = por %p57, %p58
    %p60 = scmp.ne.s32.totalorder %s49, %s50
    %p61 = scmp.eq.s32.totalorder %s15, 0
    %p62 = por %p60, %p61
    %p63 = scmp.ne.s32.totalorder %s49, %s50
    %p64 = scmp.eq.s32.totalorder %s16, 1
    %p65 = por %p63, %p64
    %p67 = scmp.ne.s32.totalorder %s50, %s66
    %p68 = scmp.eq.s32.totalorder %s16, 0
    %p69 = por %p67, %p68
    %s70 = ssub.s32 %s10, %s17
    %p71 = scmp.eq.s32.totalorder %s70, 0
    %s73 = sadd.s32 %s72, 1
    %s74 = scalar_select %p71, %s72, %s73
    %p77 = pneg %p71
    %p78 = scmp.eq.s32.totalorder %s10, 1
    %p79 = por %p77, %p78
    %p80 = scmp.ne.s32.totalorder %s72, %s75
    %p81 = scmp.eq.s32.totalorder %s10, 0
    %p82 = por %p80, %p81
    %p83 = scmp.ne.s32.totalorder %s72, %s75
    %p84 = scmp.eq.s32.totalorder %s15, 1
    %p85 = por %p83, %p84
    %p86 = scmp.ne.s32.totalorder %s75, %s76
    %p87 = scmp.eq.s32.totalorder %s15, 0
    %p88 = por %p86, %p87
    %p89 = scmp.ne.s32.totalorder %s75, %s76
    %p90 = scmp.eq.s32.totalorder %s16, 1
    %p91 = por %p89, %p90
    %p93 = scmp.ne.s32.totalorder %s76, %s92
    %p94 = scmp.eq.s32.totalorder %s16, 0
    %p95 = por %p93, %p94
    %s96 = ssub.s32 %s10, %s17
    %p97 = scmp.eq.s32.totalorder %s96, 0
    %s99 = sadd.s32 %s98, 1
    %s100 = scalar_select %p97, %s98, %s99
    %p103 = pneg %p97
    %p104 = scmp.eq.s32.totalorder %s10, 1
    %p105 = por %p103, %p104
    %p106 = scmp.ne.s32.totalorder %s98, %s101
    %p107 = scmp.eq.s32.totalorder %s10, 0
    %p108 = por %p106, %p107
    %p109 = scmp.ne.s32.totalorder %s98, %s101
    %p110 = scmp.eq.s32.totalorder %s15, 1
    %p111 = por %p109, %p110
    %p112 = scmp.ne.s32.totalorder %s101, %s102
    %p113 = scmp.eq.s32.totalorder %s15, 0
    %p114 = por %p112, %p113
    %p115 = scmp.ne.s32.totalorder %s101, %s102
    %p116 = scmp.eq.s32.totalorder %s16, 1
    %p117 = por %p115, %p116
    %p119 = scmp.ne.s32.totalorder %s102, %s118
    %p120 = scmp.eq.s32.totalorder %s16, 0
    %p121 = por %p119, %p120
    %s122 = ssub.s32 %s10, %s17
    %p123 = scmp.eq.s32.totalorder %s122, 0
    %s125 = sadd.s32 %s124, 1
    %s126 = scalar_select %p123, %s124, %s125
    %p129 = pneg %p123
    %p130 = scmp.eq.s32.totalorder %s10, 1
    %p131 = por %p129, %p130
    %p132 = scmp.ne.s32.totalorder %s124, %s127
    %p133 = scmp.eq.s32.totalorder %s10, 0
    %p134 = por %p132, %p133
    %p135 = scmp.ne.s32.totalorder %s124, %s127
    %p136 = scmp.eq.s32.totalorder %s15, 1
    %p137 = por %p135, %p136
    %p138 = scmp.ne.s32.totalorder %s127, %s128
    %p139 = scmp.eq.s32.totalorder %s15, 0
    %p140 = por %p138, %p139
    %p141 = scmp.ne.s32.totalorder %s127, %s128
    %p142 = scmp.eq.s32.totalorder %s16, 1
    %p143 = por %p141, %p142
    %p145 = scmp.ne.s32.totalorder %s128, %s144
    %p146 = scmp.eq.s32.totalorder %s16, 0
    %p147 = por %p145, %p146
    %p148 = scmp.le.s32.totalorder 1, %s10
    %p149 = scmp.lt.s32.totalorder %s10, 3
    %p150 = pnand %p148, %p149
    %p151 = pneg %p150
    // Predicated region
    $region9: #{transformer_forward.36} parent=5 // pred_check
      _
    $region10: #{transformer_forward.36} parent=5 // pred_check_branch
      %153 = sbr.rel (%p150) target = $region12
    $region11: #{transformer_forward.36} parent=5 // pred_region
      %s154 = ssub.s32 %s10, 1
    $region12: #{transformer_forward.36} parent=5 // pred_fallthru
      _
    %p155 = scmp.lt.s32.totalorder %s10, 2
    // Predicated region
    $region13: #{transformer_forward.36} parent=5 // pred_check
      %p156 = pneg %p155
    $region14: #{transformer_forward.36} parent=5 // pred_check_branch
      %158 = sbr.rel (%p156) target = $region16
    $region15: #{transformer_forward.36} parent=5 // pred_region
      // Predicated region
      $region17: #{transformer_forward.36} parent=15 // pred_check
        %p159 = pneg %p30
      $region18: #{transformer_forward.36} parent=15 // pred_check_branch
        %161 = sbr.rel (%p159) target = $region20
      $region19: #{transformer_forward.36} parent=15 // pred_region
        %p162 = scmp.lt.s32.totalorder %s10, 1
        %s163 = scalar_select %p162, %s10, 1
        %s164 = smul.addr %s163, 4
        %s165 = smul.addr %s164, 8
        %s166 = scalar_lea.vmem %s0, %s165
      $region20: #{transformer_forward.36} parent=15 // pred_fallthru
        _
      // Predicated region
      $region21: #{transformer_forward.36} parent=15 // pred_check
        %p167 = pneg %p56
      $region22: #{transformer_forward.36} parent=15 // pred_check_branch
        %169 = sbr.rel (%p167) target = $region24
      $region23: #{transformer_forward.36} parent=15 // pred_region
        %p170 = scmp.lt.s32.totalorder %s10, 1
        %s171 = scalar_select %p170, %s10, 1
        %s172 = smul.addr %s171, 4
        %s173 = smul.addr %s172, 8
        %s174 = scalar_lea.vmem %s1, %s173
      $region24: #{transformer_forward.36} parent=15 // pred_fallthru
        _
      // Predicated region
      $region25: #{transformer_forward.36} parent=15 // pred_check
        %p175 = pneg %p82
      $region26: #{transformer_forward.36} parent=15 // pred_check_branch
        %177 = sbr.rel (%p175) target = $region28
      $region27: #{transformer_forward.36} parent=15 // pred_region
        %p178 = scmp.lt.s32.totalorder %s10, 1
        %s179 = scalar_select %p178, %s10, 1
        %s180 = smul.addr %s179, 4
        %s181 = smul.addr %s180, 8
        %s182 = scalar_lea.vmem %s2, %s181
      $region28: #{transformer_forward.36} parent=15 // pred_fallthru
        _
      // Predicated region
      $region29: #{transformer_forward.36} parent=15 // pred_check
        %p183 = pneg %p108
      $region30: #{transformer_forward.36} parent=15 // pred_check_branch
        %185 = sbr.rel (%p183) target = $region32
      $region31: #{transformer_forward.36} parent=15 // pred_region
        %p186 = scmp.lt.s32.totalorder %s10, 1
        %s187 = scalar_select %p186, %s10, 1
        %s188 = scalar_lea.vmem %s3, %s187
      $region32: #{transformer_forward.36} parent=15 // pred_fallthru
        _
    $region16: #{transformer_forward.36} parent=5 // pred_fallthru
      _
    %p189 = scmp.le.s32.totalorder 1, %s10
    %p190 = scmp.lt.s32.totalorder %s10, 3
    %p191 = pnand %p189, %p190
    %p192 = pneg %p191
    // Predicated region
    $region33: #{transformer_forward.36} parent=5 // pred_check
      _
    $region34: #{transformer_forward.36} parent=5 // pred_check_branch
      %194 = sbr.rel (%p191) target = $region36
    $region35: #{transformer_forward.36} parent=5 // pred_region
      %s195 = ssub.s32 %s10, 1
      %p196 = scmp.lt.s32.totalorder %s15, 1
      %s197 = scalar_select %p196, %s15, 1
      %s198 = smul.addr %s197, 4
      %s199 = smul.addr %s198, 8
      %s200 = scalar_lea.vmem %s0, %s199
      %p201 = pneg %p36
      %p202 = pneg %p33
      %p203 = scmp.lt.s32.totalorder %s15, 1
      %s204 = scalar_select %p203, %s15, 1
      %s205 = smul.addr %s204, 4
      %s206 = smul.addr %s205, 8
      %s207 = scalar_lea.vmem %s1, %s206
      %p208 = pneg %p62
      %p209 = pneg %p59
      %p210 = scmp.lt.s32.totalorder %s15, 1
      %s211 = scalar_select %p210, %s15, 1
      %s212 = smul.addr %s211, 4
      %s213 = smul.addr %s212, 8
      %s214 = scalar_lea.vmem %s2, %s213
      %p215 = pneg %p88
      %p216 = pneg %p85
      %p217 = scmp.lt.s32.totalorder %s15, 1
      %s218 = scalar_select %p217, %s15, 1
      %s219 = scalar_lea.vmem %s3, %s218
      %p220 = pneg %p114
      %p221 = pneg %p111
      %p222 = pneg %p140
      %p223 = pneg %p137
      %p224 = scmp.lt.s32.totalorder %s15, 1
      %s225 = scalar_select %p224, %s15, 1
      %s226 = smul.addr %s225, 4
      %s227 = smul.addr %s226, 8
      %s228 = scalar_lea.vmem %s4, %s227
      %p229 = scmp.lt.s32.totalorder %s15, 1
      %s230 = scalar_select %p229, %s15, 1
      %s231 = smul.addr %s230, 4
      %s232 = smul.addr %s231, 8
      %s233 = scalar_lea.vmem %s0, %s232
      %p234 = scmp.lt.s32.totalorder %s15, 1
      %s235 = scalar_select %p234, %s15, 1
      %s236 = smul.addr %s235, 4
      %s237 = smul.addr %s236, 8
      %s238 = scalar_lea.vmem %s1, %s237
      %p239 = scmp.lt.s32.totalorder %s15, 1
      %s240 = scalar_select %p239, %s15, 1
      %s241 = smul.addr %s240, 4
      %s242 = smul.addr %s241, 8
      %s243 = scalar_lea.vmem %s2, %s242
      %p244 = scmp.lt.s32.totalorder %s15, 1
      %s245 = scalar_select %p244, %s15, 1
      %s246 = scalar_lea.vmem %s3, %s245
      %p247 = scmp.lt.s32.totalorder %s15, 1
      %s248 = scalar_select %p247, %s15, 1
      %s249 = smul.addr %s248, 4
      %s250 = smul.addr %s249, 8
      %s251 = scalar_lea.vmem %s4, %s250
      %v253 = vld [vmem:[%s233] sm:$0xff]
      %v254 = vld [vmem:[%s233 + $0x8] sm:$0xff]
      %v255 = vld [vmem:[%s233 + $0x10] sm:$0xff]
      %v256 = vld [vmem:[%s233 + $0x18] sm:$0xff]
      %v257 = vpack.c.bf16 %v253, %v253
      %v258 = vpack.c.bf16 %v254, %v254
      %v259 = vpack.c.bf16 %v255, %v255
      %v260 = vpack.c.bf16 %v256, %v256
      %v261 = vld [vmem:[%s238] sm:$0xff]
      %v262 = vld [vmem:[%s238 + $0x8] sm:$0xff]
      %v263 = vld [vmem:[%s238 + $0x10] sm:$0xff]
      %v264 = vld [vmem:[%s238 + $0x18] sm:$0xff]
      %v265 = vpack.c.bf16 %v261, %v261
      %v266 = vpack.c.bf16 %v262, %v262
      %v267 = vpack.c.bf16 %v263, %v263
      %v268 = vpack.c.bf16 %v264, %v264
      %v269 = vld [vmem:[%s243] sm:$0xff]
      %v270 = vld [vmem:[%s243 + $0x8] sm:$0xff]
      %v271 = vld [vmem:[%s243 + $0x10] sm:$0xff]
      %v272 = vld [vmem:[%s243 + $0x18] sm:$0xff]
      %v273 = vpack.c.bf16 %v269, %v269
      %v274 = vpack.c.bf16 %v270, %v270
      %v275 = vpack.c.bf16 %v271, %v271
      %v276 = vpack.c.bf16 %v272, %v272
      %vm277 = vcmask 64512
      %v279 = vsel %vm277, %v257, 0
      %v282 = vsel %vm277, %v265, 0
      %284 = vmatprep.subr.bf16.mxu0 0
      %285 = vmatpush1.bf16.xpose.msra.mxu0 0
      %286 = vmatprep.subr.bf16.mxu0 0
      %287 = vmatpush1.bf16.xpose.msra.mxu0 0
      %288 = vmatprep.subr.bf16.mxu0 0
      %289 = vmatpush1.bf16.xpose.msra.mxu0 0
      %290 = vmatprep.subr.bf16.mxu0 0
      %291 = vmatpush1.bf16.xpose.msra.mxu0 0
      %292 = vmatprep.subr.bf16.mxu0 0
      %293 = vmatpush1.bf16.xpose.msra.mxu0 0
      %294 = vmatprep.subr.bf16.mxu0 0
      %295 = vmatpush1.bf16.xpose.msra.mxu0 0
      %296 = vmatprep.subr.bf16.mxu0 0
      %297 = vmatpush1.bf16.xpose.msra.mxu0 0
      %298 = vmatprep.subr.bf16.mxu0 0
      %299 = vmatpush1.bf16.xpose.msra.mxu0 %v282
      %300 = vmatprep.subr.bf16.mxu0 0
      %301 = vmatpush2.bf16.xpose.msra.mxu0 0
      %302 = vmatprep.subr.bf16.mxu0 0
      %303 = vmatpush2.bf16.xpose.msra.mxu0 0
      %304 = vmatprep.subr.bf16.mxu0 0
      %305 = vmatpush2.bf16.xpose.msra.mxu0 0
      %306 = vmatprep.subr.bf16.mxu0 0
      %307 = vmatpush2.bf16.xpose.msra.mxu0 0
      %308 = vmatprep.subr.bf16.mxu0 0
      %309 = vmatpush2.bf16.xpose.msra.mxu0 0
      %310 = vmatprep.subr.bf16.mxu0 0
      %311 = vmatpush2.bf16.xpose.msra.mxu0 0
      %312 = vmatprep.subr.bf16.mxu0 0
      %313 = vmatpush2.bf16.xpose.msra.mxu0 0
      %314 = vmatprep.subr.bf16.mxu0 0
      %315 = vmatpush2.bf16.xpose.msra.mxu0 0
      %316 = vmatprep.mubr.bf16.mxu0 0
      %317 = vmatmul.mubr.bf16.gmra.mxu0 %v279
      %v318 = vpop.f32.mrf.mxu0
      %v319 = vadd.f32 0.0, %v318
      %v320 = vpop.f32.mrf.mxu0
      %v321 = vpop.f32.mrf.mxu0
      %v322 = vpop.f32.mrf.mxu0
      %323 = vdwg.mxu0
      %v325 = vsel %vm277, %v258, 0
      %v328 = vsel %vm277, %v266, 0
      %330 = vmatprep.subr.bf16.mxu0 0
      %331 = vmatpush1.bf16.xpose.msra.mxu0 0
      %332 = vmatprep.subr.bf16.mxu0 0
      %333 = vmatpush1.bf16.xpose.msra.mxu0 0
      %334 = vmatprep.subr.bf16.mxu0 0
      %335 = vmatpush1.bf16.xpose.msra.mxu0 0
      %336 = vmatprep.subr.bf16.mxu0 0
      %337 = vmatpush1.bf16.xpose.msra.mxu0 0
      %338 = vmatprep.subr.bf16.mxu0 0
      %339 = vmatpush1.bf16.xpose.msra.mxu0 0
      %340 = vmatprep.subr.bf16.mxu0 0
      %341 = vmatpush1.bf16.xpose.msra.mxu0 0
      %342 = vmatprep.subr.bf16.mxu0 0
      %343 = vmatpush1.bf16.xpose.msra.mxu0 0
      %344 = vmatprep.subr.bf16.mxu0 0
      %345 = vmatpush1.bf16.xpose.msra.mxu0 %v328
      %346 = vmatprep.subr.bf16.mxu0 0
      %347 = vmatpush2.bf16.xpose.msra.mxu0 0
      %348 = vmatprep.subr.bf16.mxu0 0
      %349 = vmatpush2.bf16.xpose.msra.mxu0 0
      %350 = vmatprep.subr.bf16.mxu0 0
      %351 = vmatpush2.bf16.xpose.msra.mxu0 0
      %352 = vmatprep.subr.bf16.mxu0 0
      %353 = vmatpush2.bf16.xpose.msra.mxu0 0
      %354 = vmatprep.subr.bf16.mxu0 0
      %355 = vmatpush2.bf16.xpose.msra.mxu0 0
      %356 = vmatprep.subr.bf16.mxu0 0
      %357 = vmatpush2.bf16.xpose.msra.mxu0 0
      %358 = vmatprep.subr.bf16.mxu0 0
      %359 = vmatpush2.bf16.xpose.msra.mxu0 0
      %360 = vmatprep.subr.bf16.mxu0 0
      %361 = vmatpush2.bf16.xpose.msra.mxu0 0
      %362 = vmatprep.mubr.bf16.mxu0 0
      %363 = vmatmul.mubr.bf16.gmra.mxu0 %v325
      %v364 = vpop.f32.mrf.mxu0
      %v365 = vadd.f32 0.0, %v364
      %v366 = vpop.f32.mrf.mxu0
      %v367 = vpop.f32.mrf.mxu0
      %v368 = vpop.f32.mrf.mxu0
      %369 = vdwg.mxu0
      %v371 = vsel %vm277, %v259, 0
      %v374 = vsel %vm277, %v267, 0
      %376 = vmatprep.subr.bf16.mxu0 0
      %377 = vmatpush1.bf16.xpose.msra.mxu0 0
      %378 = vmatprep.subr.bf16.mxu0 0
      %379 = vmatpush1.bf16.xpose.msra.mxu0 0
      %380 = vmatprep.subr.bf16.mxu0 0
      %381 = vmatpush1.bf16.xpose.msra.mxu0 0
      %382 = vmatprep.subr.bf16.mxu0 0
      %383 = vmatpush1.bf16.xpose.msra.mxu0 0
      %384 = vmatprep.subr.bf16.mxu0 0
      %385 = vmatpush1.bf16.xpose.msra.mxu0 0
      %386 = vmatprep.subr.bf16.mxu0 0
      %387 = vmatpush1.bf16.xpose.msra.mxu0 0
      %388 = vmatprep.subr.bf16.mxu0 0
      %389 = vmatpush1.bf16.xpose.msra.mxu0 0
      %390 = vmatprep.subr.bf16.mxu0 0
      %391 = vmatpush1.bf16.xpose.msra.mxu0 %v374
      %392 = vmatprep.subr.bf16.mxu0 0
      %393 = vmatpush2.bf16.xpose.msra.mxu0 0
      %394 = vmatprep.subr.bf16.mxu0 0
      %395 = vmatpush2.bf16.xpose.msra.mxu0 0
      %396 = vmatprep.subr.bf16.mxu0 0
      %397 = vmatpush2.bf16.xpose.msra.mxu0 0
      %398 = vmatprep.subr.bf16.mxu0 0
      %399 = vmatpush2.bf16.xpose.msra.mxu0 0
      %400 = vmatprep.subr.bf16.mxu0 0
      %401 = vmatpush2.bf16.xpose.msra.mxu0 0
      %402 = vmatprep.subr.bf16.mxu0 0
      %403 = vmatpush2.bf16.xpose.msra.mxu0 0
      %404 = vmatprep.subr.bf16.mxu0 0
      %405 = vmatpush2.bf16.xpose.msra.mxu0 0
      %406 = vmatprep.subr.bf16.mxu0 0
      %407 = vmatpush2.bf16.xpose.msra.mxu0 0
      %408 = vmatprep.mubr.bf16.mxu0 0
      %409 = vmatmul.mubr.bf16.gmra.mxu0 %v371
      %v410 = vpop.f32.mrf.mxu0
      %v411 = vadd.f32 0.0, %v410
      %v412 = vpop.f32.mrf.mxu0
      %v413 = vpop.f32.mrf.mxu0
      %v414 = vpop.f32.mrf.mxu0
      %415 = vdwg.mxu0
      %v417 = vsel %vm277, %v260, 0
      %v420 = vsel %vm277, %v268, 0
      %422 = vmatprep.subr.bf16.mxu0 0
      %423 = vmatpush1.bf16.xpose.msra.mxu0 0
      %424 = vmatprep.subr.bf16.mxu0 0
      %425 = vmatpush1.bf16.xpose.msra.mxu0 0
      %426 = vmatprep.subr.bf16.mxu0 0
      %427 = vmatpush1.bf16.xpose.msra.mxu0 0
      %428 = vmatprep.subr.bf16.mxu0 0
      %429 = vmatpush1.bf16.xpose.msra.mxu0 0
      %430 = vmatprep.subr.bf16.mxu0 0
      %431 = vmatpush1.bf16.xpose.msra.mxu0 0
      %432 = vmatprep.subr.bf16.mxu0 0
      %433 = vmatpush1.bf16.xpose.msra.mxu0 0
      %434 = vmatprep.subr.bf16.mxu0 0
      %435 = vmatpush1.bf16.xpose.msra.mxu0 0
      %436 = vmatprep.subr.bf16.mxu0 0
      %437 = vmatpush1.bf16.xpose.msra.mxu0 %v420
      %438 = vmatprep.subr.bf16.mxu0 0
      %439 = vmatpush2.bf16.xpose.msra.mxu0 0
      %440 = vmatprep.subr.bf16.mxu0 0
      %441 = vmatpush2.bf16.xpose.msra.mxu0 0
      %442 = vmatprep.subr.bf16.mxu0 0
      %443 = vmatpush2.bf16.xpose.msra.mxu0 0
      %444 = vmatprep.subr.bf16.mxu0 0
      %445 = vmatpush2.bf16.xpose.msra.mxu0 0
      %446 = vmatprep.subr.bf16.mxu0 0
      %447 = vmatpush2.bf16.xpose.msra.mxu0 0
      %448 = vmatprep.subr.bf16.mxu0 0
      %449 = vmatpush2.bf16.xpose.msra.mxu0 0
      %450 = vmatprep.subr.bf16.mxu0 0
      %451 = vmatpush2.bf16.xpose.msra.mxu0 0
      %452 = vmatprep.subr.bf16.mxu0 0
      %453 = vmatpush2.bf16.xpose.msra.mxu0 0
      %454 = vmatprep.mubr.bf16.mxu0 0
      %455 = vmatmul.mubr.bf16.gmra.mxu0 %v417
      %v456 = vpop.f32.mrf.mxu0
      %v457 = vadd.f32 0.0, %v456
      %v458 = vpop.f32.mrf.mxu0
      %v459 = vpop.f32.mrf.mxu0
      %v460 = vpop.f32.mrf.mxu0
      %461 = vdwg.mxu0
      %v462 = vmul.f32 %v319, 0.35355338
      %v463 = vmul.f32 %v365, 0.35355338
      %v464 = vmul.f32 %v411, 0.35355338
      %v465 = vmul.f32 %v457, 0.35355338
      %v466 = vld [vmem:[%s246] sm:$0x1]
      %v468 = vlaneseq
      %v469 = vshrl.u32 %v468, 7
      %v470 = vsub.s32 0, %v469
      %v471 = vrot.slane %v466, %v470
      %vm473 = vcmp.eq.f32.partialorder %v471, 0.0
      %v474 = vsel %vm473, 1, 0
      %vm475 = vcmp.eq.s32.totalorder %v474, 1
      %v476 = vsel %vm475, -1e+09, %v462
      %v477 = vsel %vm475, -1e+09, %v463
      %v478 = vsel %vm475, -1e+09, %v464
      %v479 = vsel %vm475, -1e+09, %v465
      %v480 = vsel %vm277, %v476, -inf
      %481 = vmax.xlane.f32.xlu0 %v480
      %v482 = vpop.xlane.xlu0 %481
      %v483 = vsel %vm277, %v477, -inf
      %484 = vmax.xlane.f32.xlu0 %v483
      %v485 = vpop.xlane.xlu0 %484
      %v486 = vsel %vm277, %v478, -inf
      %487 = vmax.xlane.f32.xlu0 %v486
      %v488 = vpop.xlane.xlu0 %487
      %v489 = vsel %vm277, %v479, -inf
      %490 = vmax.xlane.f32.xlu0 %v489
      %v491 = vpop.xlane.xlu0 %490
      %v492 = vsub.f32 %v476, %v482
      %v493 = vsub.f32 %v477, %v485
      %v494 = vsub.f32 %v478, %v488
      %v495 = vsub.f32 %v479, %v491
      %v496 = vmul.f32 %v492, 1.442695
      %v497 = vpow.pop %v496
      %v498 = vmul.f32 %v493, 1.442695
      %v499 = vpow.pop %v498
      %v500 = vmul.f32 %v494, 1.442695
      %v501 = vpow.pop %v500
      %v502 = vmul.f32 %v495, 1.442695
      %v503 = vpow.pop %v502
      %v504 = vsel %vm277, %v497, 0.0
      %505 = vadd.xlane.f32.xlu0 %v504
      %v506 = vpop.xlane.xlu0 %505
      %v507 = vsel %vm277, %v499, 0.0
      %508 = vadd.xlane.f32.xlu0 %v507
      %v509 = vpop.xlane.xlu0 %508
      %v510 = vsel %vm277, %v501, 0.0
      %511 = vadd.xlane.f32.xlu0 %v510
      %v512 = vpop.xlane.xlu0 %511
      %v513 = vsel %vm277, %v503, 0.0
      %514 = vadd.xlane.f32.xlu0 %v513
      %v515 = vpop.xlane.xlu0 %514
      %v516 = vrcp.pop %v506
      %v517 = vrcp.pop %v509
      %v518 = vrcp.pop %v512
      %v519 = vrcp.pop %v515
      %v520 = vmul.f32 %v497, %v516
      %v521 = vmul.f32 %v499, %v517
      %v522 = vmul.f32 %v501, %v518
      %v523 = vmul.f32 %v503, %v519
      %v524 = vpack.c.bf16 %v520, %v520
      %v525 = vpack.c.bf16 %v521, %v521
      %v526 = vpack.c.bf16 %v522, %v522
      %v527 = vpack.c.bf16 %v523, %v523
      %v529 = vsel %vm277, %v524, 0
      %vm531 = vcmask 1043456
      %v533 = vsel %vm531, %v273, 0
      %535 = vmatprep.subr.bf16.mxu0 0
      %536 = vmatpush1.bf16.msra.mxu0 0
      %537 = vmatprep.subr.bf16.mxu0 0
      %538 = vmatpush1.bf16.msra.mxu0 0
      %539 = vmatprep.subr.bf16.mxu0 0
      %540 = vmatpush1.bf16.msra.mxu0 0
      %541 = vmatprep.subr.bf16.mxu0 0
      %542 = vmatpush1.bf16.msra.mxu0 0
      %543 = vmatprep.subr.bf16.mxu0 0
      %544 = vmatpush1.bf16.msra.mxu0 0
      %545 = vmatprep.subr.bf16.mxu0 0
      %546 = vmatpush1.bf16.msra.mxu0 0
      %547 = vmatprep.subr.bf16.mxu0 0
      %548 = vmatpush1.bf16.msra.mxu0 0
      %549 = vmatprep.subr.bf16.mxu0 0
      %550 = vmatpush1.bf16.msra.mxu0 %v533
      %551 = vmatprep.subr.bf16.mxu0 0
      %552 = vmatpush2.bf16.msra.mxu0 0
      %553 = vmatprep.subr.bf16.mxu0 0
      %554 = vmatpush2.bf16.msra.mxu0 0
      %555 = vmatprep.subr.bf16.mxu0 0
      %556 = vmatpush2.bf16.msra.mxu0 0
      %557 = vmatprep.subr.bf16.mxu0 0
      %558 = vmatpush2.bf16.msra.mxu0 0
      %559 = vmatprep.subr.bf16.mxu0 0
      %560 = vmatpush2.bf16.msra.mxu0 0
      %561 = vmatprep.subr.bf16.mxu0 0
      %562 = vmatpush2.bf16.msra.mxu0 0
      %563 = vmatprep.subr.bf16.mxu0 0
      %564 = vmatpush2.bf16.msra.mxu0 0
      %565 = vmatprep.subr.bf16.mxu0 0
      %566 = vmatpush2.bf16.msra.mxu0 0
      %567 = vmatprep.mubr.bf16.mxu0 0
      %568 = vmatmul.mubr.bf16.gmra.mxu0 %v529
      %v569 = vpop.f32.mrf.mxu0
      %v570 = vadd.f32 0.0, %v569
      %v571 = vpop.f32.mrf.mxu0
      %v572 = vpop.f32.mrf.mxu0
      %v573 = vpop.f32.mrf.mxu0
      %574 = vdwg.mxu0
      %v576 = vsel %vm277, %v525, 0
      %v579 = vsel %vm531, %v274, 0
      %581 = vmatprep.subr.bf16.mxu0 0
      %582 = vmatpush1.bf16.msra.mxu0 0
      %583 = vmatprep.subr.bf16.mxu0 0
      %584 = vmatpush1.bf16.msra.mxu0 0
      %585 = vmatprep.subr.bf16.mxu0 0
      %586 = vmatpush1.bf16.msra.mxu0 0
      %587 = vmatprep.subr.bf16.mxu0 0
      %588 = vmatpush1.bf16.msra.mxu0 0
      %589 = vmatprep.subr.bf16.mxu0 0
      %590 = vmatpush1.bf16.msra.mxu0 0
      %591 = vmatprep.subr.bf16.mxu0 0
      %592 = vmatpush1.bf16.msra.mxu0 0
      %593 = vmatprep.subr.bf16.mxu0 0
      %594 = vmatpush1.bf16.msra.mxu0 0
      %595 = vmatprep.subr.bf16.mxu0 0
      %596 = vmatpush1.bf16.msra.mxu0 %v579
      %597 = vmatprep.subr.bf16.mxu0 0
      %598 = vmatpush2.bf16.msra.mxu0 0
      %599 = vmatprep.subr.bf16.mxu0 0
      %600 = vmatpush2.bf16.msra.mxu0 0
      %601 = vmatprep.subr.bf16.mxu0 0
      %602 = vmatpush2.bf16.msra.mxu0 0
      %603 = vmatprep.subr.bf16.mxu0 0
      %604 = vmatpush2.bf16.msra.mxu0 0
      %605 = vmatprep.subr.bf16.mxu0 0
      %606 = vmatpush2.bf16.msra.mxu0 0
      %607 = vmatprep.subr.bf16.mxu0 0
      %608 = vmatpush2.bf16.msra.mxu0 0
      %609 = vmatprep.subr.bf16.mxu0 0
      %610 = vmatpush2.bf16.msra.mxu0 0
      %611 = vmatprep.subr.bf16.mxu0 0
      %612 = vmatpush2.bf16.msra.mxu0 0
      %613 = vmatprep.mubr.bf16.mxu0 0
      %614 = vmatmul.mubr.bf16.gmra.mxu0 %v576
      %v615 = vpop.f32.mrf.mxu0
      %v616 = vadd.f32 0.0, %v615
      %v617 = vpop.f32.mrf.mxu0
      %v618 = vpop.f32.mrf.mxu0
      %v619 = vpop.f32.mrf.mxu0
      %620 = vdwg.mxu0
      %v622 = vsel %vm277, %v526, 0
      %v625 = vsel %vm531, %v275, 0
      %627 = vmatprep.subr.bf16.mxu0 0
      %628 = vmatpush1.bf16.msra.mxu0 0
      %629 = vmatprep.subr.bf16.mxu0 0
      %630 = vmatpush1.bf16.msra.mxu0 0
      %631 = vmatprep.subr.bf16.mxu0 0
      %632 = vmatpush1.bf16.msra.mxu0 0
      %633 = vmatprep.subr.bf16.mxu0 0
      %634 = vmatpush1.bf16.msra.mxu0 0
      %635 = vmatprep.subr.bf16.mxu0 0
      %636 = vmatpush1.bf16.msra.mxu0 0
      %637 = vmatprep.subr.bf16.mxu0 0
      %638 = vmatpush1.bf16.msra.mxu0 0
      %639 = vmatprep.subr.bf16.mxu0 0
      %640 = vmatpush1.bf16.msra.mxu0 0
      %641 = vmatprep.subr.bf16.mxu0 0
      %642 = vmatpush1.bf16.msra.mxu0 %v625
      %643 = vmatprep.subr.bf16.mxu0 0
      %644 = vmatpush2.bf16.msra.mxu0 0
      %645 = vmatprep.subr.bf16.mxu0 0
      %646 = vmatpush2.bf16.msra.mxu0 0
      %647 = vmatprep.subr.bf16.mxu0 0
      %648 = vmatpush2.bf16.msra.mxu0 0
      %649 = vmatprep.subr.bf16.mxu0 0
      %650 = vmatpush2.bf16.msra.mxu0 0
      %651 = vmatprep.subr.bf16.mxu0 0
      %652 = vmatpush2.bf16.msra.mxu0 0
      %653 = vmatprep.subr.bf16.mxu0 0
      %654 = vmatpush2.bf16.msra.mxu0 0
      %655 = vmatprep.subr.bf16.mxu0 0
      %656 = vmatpush2.bf16.msra.mxu0 0
      %657 = vmatprep.subr.bf16.mxu0 0
      %658 = vmatpush2.bf16.msra.mxu0 0
      %659 = vmatprep.mubr.bf16.mxu0 0
      %660 = vmatmul.mubr.bf16.gmra.mxu0 %v622
      %v661 = vpop.f32.mrf.mxu0
      %v662 = vadd.f32 0.0, %v661
      %v663 = vpop.f32.mrf.mxu0
      %v664 = vpop.f32.mrf.mxu0
      %v665 = vpop.f32.mrf.mxu0
      %666 = vdwg.mxu0
      %v668 = vsel %vm277, %v527, 0
      %v671 = vsel %vm531, %v276, 0
      %673 = vmatprep.subr.bf16.mxu0 0
      %674 = vmatpush1.bf16.msra.mxu0 0
      %675 = vmatprep.subr.bf16.mxu0 0
      %676 = vmatpush1.bf16.msra.mxu0 0
      %677 = vmatprep.subr.bf16.mxu0 0
      %678 = vmatpush1.bf16.msra.mxu0 0
      %679 = vmatprep.subr.bf16.mxu0 0
      %680 = vmatpush1.bf16.msra.mxu0 0
      %681 = vmatprep.subr.bf16.mxu0 0
      %682 = vmatpush1.bf16.msra.mxu0 0
      %683 = vmatprep.subr.bf16.mxu0 0
      %684 = vmatpush1.bf16.msra.mxu0 0
      %685 = vmatprep.subr.bf16.mxu0 0
      %686 = vmatpush1.bf16.msra.mxu0 0
      %687 = vmatprep.subr.bf16.mxu0 0
      %688 = vmatpush1.bf16.msra.mxu0 %v671
      %689 = vmatprep.subr.bf16.mxu0 0
      %690 = vmatpush2.bf16.msra.mxu0 0
      %691 = vmatprep.subr.bf16.mxu0 0
      %692 = vmatpush2.bf16.msra.mxu0 0
      %693 = vmatprep.subr.bf16.mxu0 0
      %694 = vmatpush2.bf16.msra.mxu0 0
      %695 = vmatprep.subr.bf16.mxu0 0
      %696 = vmatpush2.bf16.msra.mxu0 0
      %697 = vmatprep.subr.bf16.mxu0 0
      %698 = vmatpush2.bf16.msra.mxu0 0
      %699 = vmatprep.subr.bf16.mxu0 0
      %700 = vmatpush2.bf16.msra.mxu0 0
      %701 = vmatprep.subr.bf16.mxu0 0
      %702 = vmatpush2.bf16.msra.mxu0 0
      %703 = vmatprep.subr.bf16.mxu0 0
      %704 = vmatpush2.bf16.msra.mxu0 0
      %705 = vmatprep.mubr.bf16.mxu0 0
      %706 = vmatmul.mubr.bf16.gmra.mxu0 %v668
      %v707 = vpop.f32.mrf.mxu0
      %v708 = vadd.f32 0.0, %v707
      %v709 = vpop.f32.mrf.mxu0
      %v710 = vpop.f32.mrf.mxu0
      %v711 = vpop.f32.mrf.mxu0
      %712 = vdwg.mxu0
      %713 = vst.msk [vmem:[%s251] sm:$0xff] %vm277, %v570
      %714 = vst.msk [vmem:[%s251 + $0x8] sm:$0xff] %vm277, %v616
      %715 = vst.msk [vmem:[%s251 + $0x10] sm:$0xff] %vm277, %v662
      %716 = vst.msk [vmem:[%s251 + $0x18] sm:$0xff] %vm277, %v708
      %p717 = scmp.lt.s32.totalorder %s15, 1
      %s718 = scalar_select %p717, %s15, 1
      %s719 = smul.addr %s718, 4
      %s720 = smul.addr %s719, 8
      %s721 = scalar_lea.vmem %s4, %s720
      // Predicated region
      $region37: #{transformer_forward.36} parent=35 // pred_check
        %p722 = pneg %p137
      $region38: #{transformer_forward.36} parent=35 // pred_check_branch
        %724 = sbr.rel (%p722) target = $region40
      $region39: #{transformer_forward.36} parent=35 // pred_region
        _
      $region40: #{transformer_forward.36} parent=35 // pred_fallthru
        _
    $region36: #{transformer_forward.36} parent=5 // pred_fallthru
      _
    %p725 = scmp.le.s32.totalorder 2, %s10
    // Predicated region
    $region41: #{transformer_forward.36} parent=5 // pred_check
      %p726 = pneg %p725
    $region42: #{transformer_forward.36} parent=5 // pred_check_branch
      %728 = sbr.rel (%p726) target = $region44
    $region43: #{transformer_forward.36} parent=5 // pred_region
      %s729 = ssub.s32 %s10, 2
      // Predicated region
      $region45: #{transformer_forward.36} parent=43 // pred_check
        %p730 = pneg %p143
      $region46: #{transformer_forward.36} parent=43 // pred_check_branch
        %732 = sbr.rel (%p730) target = $region48
      $region47: #{transformer_forward.36} parent=43 // pred_region
        %p733 = scmp.lt.s32.totalorder %s16, 1
        %s734 = scalar_select %p733, %s16, 1
        %s735 = smul.addr %s734, 4
        %s736 = smul.addr %s735, 8
        %s737 = scalar_lea.vmem %s4, %s736
      $region48: #{transformer_forward.36} parent=43 // pred_fallthru
        _
    $region44: #{transformer_forward.36} parent=5 // pred_fallthru
      _
  $region6: #{transformer_forward.36} parent=0 // loop_footer
    %s14 = sadd.s32 1, %s10
  $region7: #{transformer_forward.36} parent=0 // loop_footer_branch
    %9 = sbr.rel target = $region3
  $region8: #{transformer_forward.36} parent=0 // loop_exit
    _

// kernel: transformer_forward.39
$region0: #{transformer_forward.39}
  #allocation0 [shape = 'u32[]', space=smem, size = 0x4, offset = 0x4, fixed_abs, tag = 'smem constant byte address 0x4 - core index']
  #allocation1 [shape = 'u32[144,128]{1,0:T(1,128)}', space=vmem, size = 0x12000, scoped, tag = 'internal scratch']
  %s0 = inlined_call_operand.vmem [shape: f32[16,32], index: 0, kind: input, shape index: {}]
  %s1 = inlined_call_operand.vmem [shape: bf16[32,128], index: 1, kind: input, shape index: {}]
  %s2 = inlined_call_operand.vmem [shape: f32[1,128], index: 2, kind: input, shape index: {}]
  %s3 = inlined_call_operand.vmem [shape: bf16[128,32], index: 3, kind: input, shape index: {}]
  %s4 = inlined_call_operand.vmem [shape: f32[1,32], index: 4, kind: input, shape index: {}]
  %s5 = inlined_call_operand.vmem [shape: f32[16,32], index: 5, kind: output, shape index: {}]
  %s6 = sld [smem:[#allocation0]]
  $region30: #{transformer_forward.39} parent=0
    _
  %s8 = ssub.s32 1, %s6
  %s9 = scalar_select 0, %s8, %s6
  // Predicated region
  $region2: #{transformer_forward.39} parent=0 // pred_check
    _
  $region3: #{transformer_forward.39} parent=0 // pred_check_branch
    %11 = sbr.rel (0) target = $region5
  $region4: #{transformer_forward.39} parent=0 // pred_region
    _
  $region5: #{transformer_forward.39} parent=0 // pred_fallthru
    _
  // Predicated region
  $region6: #{transformer_forward.39} parent=0 // pred_check
    _
  $region7: #{transformer_forward.39} parent=0 // pred_check_branch
    %13 = sbr.rel (0) target = $region9
  $region8: #{transformer_forward.39} parent=0 // pred_region
    _
  $region9: #{transformer_forward.39} parent=0 // pred_fallthru
    _
  // Predicated region
  $region10: #{transformer_forward.39} parent=0 // pred_check
    _
  $region11: #{transformer_forward.39} parent=0 // pred_check_branch
    %15 = sbr.rel (0) target = $region13
  $region12: #{transformer_forward.39} parent=0 // pred_region
    _
  $region13: #{transformer_forward.39} parent=0 // pred_fallthru
    _
  // Predicated region
  $region14: #{transformer_forward.39} parent=0 // pred_check
    _
  $region15: #{transformer_forward.39} parent=0 // pred_check_branch
    %17 = sbr.rel (0) target = $region17
  $region16: #{transformer_forward.39} parent=0 // pred_region
    _
  $region17: #{transformer_forward.39} parent=0 // pred_fallthru
    _
  // Predicated region
  $region18: #{transformer_forward.39} parent=0 // pred_check
    _
  $region19: #{transformer_forward.39} parent=0 // pred_check_branch
    %19 = sbr.rel (0) target = $region21
  $region20: #{transformer_forward.39} parent=0 // pred_region
    _
  $region21: #{transformer_forward.39} parent=0 // pred_fallthru
    _
  %v21 = vld [vmem:[%s0] sm:$0xff]
  %v22 = vld [vmem:[%s0 + $0x8] sm:$0xff]
  %v23 = vpack.c.bf16 %v22, %v21
  %v24 = vld [vmem:[%s1] sm:$0xf]
  %v25 = vld [vmem:[%s1 + $0x4] sm:$0xf]
  %v26 = vld [vmem:[%s1 + $0x8] sm:$0xf]
  %v27 = vld [vmem:[%s1 + $0xc] sm:$0xf]
  %v28 = vld [vmem:[%s2] sm:$0x1]
  %v30 = vlaneseq
  %v31 = vshrl.u32 %v30, 7
  %v32 = vsub.s32 0, %v31
  %v33 = vrot.slane %v28, %v32
  %v39 = vunpack.c.l.b16 %v24
  %v40 = vunpack.c.l.b16 %v25
  %v41 = vunpack.c.l.b16 %v26
  %v42 = vunpack.c.l.b16 %v27
  %v43 = vpack.c.b16 %v40, %v39
  %v44 = vpack.c.b16 %v42, %v41
  %vm47 = vcmask 261120
  %v49 = vsel %vm47, %v23, 0
  %51 = vmatprep.subr.bf16.mxu0 0
  %52 = vmatpush1.bf16.msra.mxu0 0
  %53 = vmatprep.subr.bf16.mxu0 0
  %54 = vmatpush1.bf16.msra.mxu0 0
  %55 = vmatprep.subr.bf16.mxu0 0
  %56 = vmatpush1.bf16.msra.mxu0 0
  %57 = vmatprep.subr.bf16.mxu0 0
  %58 = vmatpush1.bf16.msra.mxu0 0
  %59 = vmatprep.subr.bf16.mxu0 0
  %60 = vmatpush1.bf16.msra.mxu0 0
  %61 = vmatprep.subr.bf16.mxu0 0
  %62 = vmatpush1.bf16.msra.mxu0 0
  %63 = vmatprep.subr.bf16.mxu0 0
  %64 = vmatpush1.bf16.msra.mxu0 %v44
  %65 = vmatprep.subr.bf16.mxu0 0
  %66 = vmatpush1.bf16.msra.mxu0 %v43
  %67 = vmatprep.subr.bf16.mxu0 0
  %68 = vmatpush2.bf16.msra.mxu0 0
  %69 = vmatprep.subr.bf16.mxu0 0
  %70 = vmatpush2.bf16.msra.mxu0 0
  %71 = vmatprep.subr.bf16.mxu0 0
  %72 = vmatpush2.bf16.msra.mxu0 0
  %73 = vmatprep.subr.bf16.mxu0 0
  %74 = vmatpush2.bf16.msra.mxu0 0
  %75 = vmatprep.subr.bf16.mxu0 0
  %76 = vmatpush2.bf16.msra.mxu0 0
  %77 = vmatprep.subr.bf16.mxu0 0
  %78 = vmatpush2.bf16.msra.mxu0 0
  %79 = vmatprep.subr.bf16.mxu0 0
  %80 = vmatpush2.bf16.msra.mxu0 0
  %81 = vmatprep.subr.bf16.mxu0 0
  %82 = vmatpush2.bf16.msra.mxu0 0
  %83 = vmatprep.mubr.bf16.mxu0 0
  %84 = vmatmul.mubr.bf16.gmra.mxu0 %v49
  %v85 = vpop.f32.mrf.mxu0
  %v86 = vadd.f32 %v33, %v85
  %v87 = vpop.f32.mrf.mxu0
  %v88 = vpop.f32.mrf.mxu0
  %v89 = vadd.f32 %v33, %v88
  %v90 = vpop.f32.mrf.mxu0
  %91 = vdwg.mxu0
  %v92 = vmax.f32 %v86, 0.0
  %v93 = vmax.f32 %v89, 0.0
  %v94 = vpack.c.bf16 %v93, %v92
  %v95 = vld [vmem:[%s3] sm:$0xf]
  %v96 = vld [vmem:[%s3 + $0x4] sm:$0xf]
  %v97 = vld [vmem:[%s3 + $0x8] sm:$0xf]
  %v98 = vld [vmem:[%s3 + $0xc] sm:$0xf]
  %v99 = vld [vmem:[%s3 + $0x10] sm:$0xf]
  %v100 = vld [vmem:[%s3 + $0x14] sm:$0xf]
  %v101 = vld [vmem:[%s3 + $0x18] sm:$0xf]
  %v102 = vld [vmem:[%s3 + $0x1c] sm:$0xf]
  %v103 = vld [vmem:[%s3 + $0x20] sm:$0xf]
  %v104 = vld [vmem:[%s3 + $0x24] sm:$0xf]
  %v105 = vld [vmem:[%s3 + $0x28] sm:$0xf]
  %v106 = vld [vmem:[%s3 + $0x2c] sm:$0xf]
  %v107 = vld [vmem:[%s3 + $0x30] sm:$0xf]
  %v108 = vld [vmem:[%s3 + $0x34] sm:$0xf]
  %v109 = vld [vmem:[%s3 + $0x38] sm:$0xf]
  %v110 = vld [vmem:[%s3 + $0x3c] sm:$0xf]
  %v111 = vld [vmem:[%s4] sm:$0x1]
  %v113 = vlaneseq
  %v114 = vshrl.u32 %v113, 7
  %v115 = vsub.s32 0, %v114
  %v116 = vrot.slane %v111, %v115
  %v134 = vunpack.c.l.b16 %v95
  %v135 = vunpack.c.l.b16 %v96
  %v136 = vunpack.c.l.b16 %v97
  %v137 = vunpack.c.l.b16 %v98
  %v138 = vunpack.c.l.b16 %v99
  %v139 = vunpack.c.l.b16 %v100
  %v140 = vunpack.c.l.b16 %v101
  %v141 = vunpack.c.l.b16 %v102
  %v142 = vunpack.c.l.b16 %v103
  %v143 = vunpack.c.l.b16 %v104
  %v144 = vunpack.c.l.b16 %v105
  %v145 = vunpack.c.l.b16 %v106
  %v146 = vunpack.c.l.b16 %v107
  %v147 = vunpack.c.l.b16 %v108
  %v148 = vunpack.c.l.b16 %v109
  %v149 = vunpack.c.l.b16 %v110
  %v150 = vpack.c.b16 %v135, %v134
  %v151 = vpack.c.b16 %v137, %v136
  %v152 = vpack.c.b16 %v139, %v138
  %v153 = vpack.c.b16 %v141, %v140
  %v154 = vpack.c.b16 %v143, %v142
  %v155 = vpack.c.b16 %v145, %v144
  %v156 = vpack.c.b16 %v147, %v146
  %v157 = vpack.c.b16 %v149, %v148
  %166 = vmatprep.subr.bf16.mxu0 0
  %167 = vmatpush1.bf16.msra.mxu0 %v157
  %168 = vmatprep.subr.bf16.mxu0 0
  %169 = vmatpush1.bf16.msra.mxu0 %v156
  %170 = vmatprep.subr.bf16.mxu0 0
  %171 = vmatpush1.bf16.msra.mxu0 %v155
  %172 = vmatprep.subr.bf16.mxu0 0
  %173 = vmatpush1.bf16.msra.mxu0 %v154
  %174 = vmatprep.subr.bf16.mxu0 0
  %175 = vmatpush1.bf16.msra.mxu0 %v153
  %176 = vmatprep.subr.bf16.mxu0 0
  %177 = vmatpush1.bf16.msra.mxu0 %v152
  %178 = vmatprep.subr.bf16.mxu0 0
  %179 = vmatpush1.bf16.msra.mxu0 %v151
  %180 = vmatprep.subr.bf16.mxu0 0
  %181 = vmatpush1.bf16.msra.mxu0 %v150
  %182 = vmatprep.subr.bf16.mxu0 0
  %183 = vmatpush2.bf16.msra.mxu0 0
  %184 = vmatprep.subr.bf16.mxu0 0
  %185 = vmatpush2.bf16.msra.mxu0 0
  %186 = vmatprep.subr.bf16.mxu0 0
  %187 = vmatpush2.bf16.msra.mxu0 0
  %188 = vmatprep.subr.bf16.mxu0 0
  %189 = vmatpush2.bf16.msra.mxu0 0
  %190 = vmatprep.subr.bf16.mxu0 0
  %191 = vmatpush2.bf16.msra.mxu0 0
  %192 = vmatprep.subr.bf16.mxu0 0
  %193 = vmatpush2.bf16.msra.mxu0 0
  %194 = vmatprep.subr.bf16.mxu0 0
  %195 = vmatpush2.bf16.msra.mxu0 0
  %196 = vmatprep.subr.bf16.mxu0 0
  %197 = vmatpush2.bf16.msra.mxu0 0
  %198 = vmatprep.mubr.bf16.mxu0 0
  %199 = vmatmul.mubr.bf16.gmra.mxu0 %v94
  %v200 = vpop.f32.mrf.mxu0
  %v201 = vadd.f32 %v116, %v200
  %v202 = vpop.f32.mrf.mxu0
  %v203 = vpop.f32.mrf.mxu0
  %v204 = vadd.f32 %v116, %v203
  %v205 = vpop.f32.mrf.mxu0
  %206 = vdwg.mxu0
  %207 = vst.msk [vmem:[%s5] sm:$0xff] %vm47, %v201
  %208 = vst.msk [vmem:[%s5 + $0x8] sm:$0xff] %vm47, %v204
  // Predicated region
  $region22: #{transformer_forward.39} parent=0 // pred_check
    _
  $region23: #{transformer_forward.39} parent=0 // pred_check_branch
    %210 = sbr.rel (0) target = $region25
  $region24: #{transformer_forward.39} parent=0 // pred_region
    _
  $region25: #{transformer_forward.39} parent=0 // pred_fallthru
    _
  // Predicated region
  $region26: #{transformer_forward.39} parent=0 // pred_check
    _
  $region27: #{transformer_forward.39} parent=0 // pred_check_branch
    %212 = sbr.rel (0) target = $region29
  $region28: #{transformer_forward.39} parent=0 // pred_region
    _
  $region29: #{transformer_forward.39} parent=0 // pred_fallthru
    _

// kernel: transformer_forward.69
$region0: #{transformer_forward.69}
  #allocation0 [shape = 'u32[]', space=smem, size = 0x4, offset = 0x4, fixed_abs, tag = 'smem constant byte address 0x4 - core index']
  #allocation1 [shape = 'u32[144,128]{1,0:T(1,128)}', space=vmem, size = 0x12000, scoped, tag = 'internal scratch']
  %s0 = inlined_call_operand.vmem [shape: f32[16,32], index: 0, kind: input, shape index: {}]
  %s1 = inlined_call_operand.vmem [shape: bf16[32,16], index: 1, kind: input, shape index: {}]
  %s2 = inlined_call_operand.vmem [shape: f32[1,16], index: 2, kind: input, shape index: {}]
  %s3 = inlined_call_operand.hbm [shape: f32[16,16], index: 3, kind: output, shape index: {}]
  %s4 = sld [smem:[#allocation0]]
  $region22: #{transformer_forward.69} parent=0
    _
  %s6 = ssub.s32 1, %s4
  %s7 = scalar_select 0, %s6, %s4
  $region1: #{transformer_forward.69} parent=0
    #allocation2 [shape = 'u8[8192]{0}', space=vmem, size = 0x2000, scoped, tag = 'output window, operand 0, single buffered']
    #allocation3 [shape = 's32[1]{0}', space=sflag, size = 0x4, scoped, tag = 'scoped memory for transformer_forward.69']
    %8 = vsyncpa [#allocation3], 0
    // Predicated region
    $region2: #{transformer_forward.69} parent=1 // pred_check
      _
    $region3: #{transformer_forward.69} parent=1 // pred_check_branch
      %10 = sbr.rel (0) target = $region5
    $region4: #{transformer_forward.69} parent=1 // pred_region
      _
    $region5: #{transformer_forward.69} parent=1 // pred_fallthru
      _
    // Predicated region
    $region6: #{transformer_forward.69} parent=1 // pred_check
      _
    $region7: #{transformer_forward.69} parent=1 // pred_check_branch
      %12 = sbr.rel (0) target = $region9
    $region8: #{transformer_forward.69} parent=1 // pred_region
      _
    $region9: #{transformer_forward.69} parent=1 // pred_fallthru
      _
    // Predicated region
    $region10: #{transformer_forward.69} parent=1 // pred_check
      _
    $region11: #{transformer_forward.69} parent=1 // pred_check_branch
      %14 = sbr.rel (0) target = $region13
    $region12: #{transformer_forward.69} parent=1 // pred_region
      _
    $region13: #{transformer_forward.69} parent=1 // pred_fallthru
      _
    %v16 = vld [vmem:[%s0] sm:$0xff]
    %v17 = vld [vmem:[%s0 + $0x8] sm:$0xff]
    %v18 = vpack.c.bf16 %v17, %v16
    %v19 = vld [vmem:[%s1] sm:$0xf]
    %v20 = vld [vmem:[%s1 + $0x4] sm:$0xf]
    %v21 = vld [vmem:[%s1 + $0x8] sm:$0xf]
    %v22 = vld [vmem:[%s1 + $0xc] sm:$0xf]
    %v23 = vld [vmem:[%s2] sm:$0x1]
    %v25 = vlaneseq
    %v26 = vshrl.u32 %v25, 7
    %v27 = vsub.s32 0, %v26
    %v28 = vrot.slane %v23, %v27
    %v34 = vunpack.c.l.b16 %v19
    %v35 = vunpack.c.l.b16 %v20
    %v36 = vunpack.c.l.b16 %v21
    %v37 = vunpack.c.l.b16 %v22
    %v38 = vpack.c.b16 %v35, %v34
    %v39 = vpack.c.b16 %v37, %v36
    %vm42 = vcmask 261120
    %v44 = vsel %vm42, %v18, 0
    %46 = vmatprep.subr.bf16.mxu0 0
    %47 = vmatpush1.bf16.msra.mxu0 0
    %48 = vmatprep.subr.bf16.mxu0 0
    %49 = vmatpush1.bf16.msra.mxu0 0
    %50 = vmatprep.subr.bf16.mxu0 0
    %51 = vmatpush1.bf16.msra.mxu0 0
    %52 = vmatprep.subr.bf16.mxu0 0
    %53 = vmatpush1.bf16.msra.mxu0 0
    %54 = vmatprep.subr.bf16.mxu0 0
    %55 = vmatpush1.bf16.msra.mxu0 0
    %56 = vmatprep.subr.bf16.mxu0 0
    %57 = vmatpush1.bf16.msra.mxu0 0
    %58 = vmatprep.subr.bf16.mxu0 0
    %59 = vmatpush1.bf16.msra.mxu0 %v39
    %60 = vmatprep.subr.bf16.mxu0 0
    %61 = vmatpush1.bf16.msra.mxu0 %v38
    %62 = vmatprep.subr.bf16.mxu0 0
    %63 = vmatpush2.bf16.msra.mxu0 0
    %64 = vmatprep.subr.bf16.mxu0 0
    %65 = vmatpush2.bf16.msra.mxu0 0
    %66 = vmatprep.subr.bf16.mxu0 0
    %67 = vmatpush2.bf16.msra.mxu0 0
    %68 = vmatprep.subr.bf16.mxu0 0
    %69 = vmatpush2.bf16.msra.mxu0 0
    %70 = vmatprep.subr.bf16.mxu0 0
    %71 = vmatpush2.bf16.msra.mxu0 0
    %72 = vmatprep.subr.bf16.mxu0 0
    %73 = vmatpush2.bf16.msra.mxu0 0
    %74 = vmatprep.subr.bf16.mxu0 0
    %75 = vmatpush2.bf16.msra.mxu0 0
    %76 = vmatprep.subr.bf16.mxu0 0
    %77 = vmatpush2.bf16.msra.mxu0 0
    %78 = vmatprep.mubr.bf16.mxu0 0
    %79 = vmatmul.mubr.bf16.gmra.mxu0 %v44
    %v80 = vpop.f32.mrf.mxu0
    %v81 = vadd.f32 %v28, %v80
    %v82 = vpop.f32.mrf.mxu0
    %v83 = vpop.f32.mrf.mxu0
    %v84 = vadd.f32 %v28, %v83
    %v85 = vpop.f32.mrf.mxu0
    %86 = vdwg.mxu0
    %vm87 = vcmask 130048
    %88 = vst.msk [vmem:[#allocation2] sm:$0xff] %vm87, %v81
    %89 = vst.msk [vmem:[#allocation2 + $0x8] sm:$0xff] %vm87, %v84
    // Predicated region
    $region14: #{transformer_forward.69} parent=1 // pred_check
      _
    $region15: #{transformer_forward.69} parent=1 // pred_check_branch
      %91 = sbr.rel (0) target = $region17
    $region16: #{transformer_forward.69} parent=1 // pred_region
      %s93 = ssub.s32 256, 256
      %94 = vsyncadd [#allocation3], %s93
      %s95 = sshll.u32 [#allocation2], 4
      %s96 = int_to_ptr.vmem [resolvable:$true] %s95
      %101 = dma.vmem_to_hbm [thread:$0]  %s96, 256, %s3, [#allocation3], 128, 128, 8
    $region17: #{transformer_forward.69} parent=1 // pred_fallthru
      _
    // Predicated region
    $region18: #{transformer_forward.69} parent=1 // pred_check
      _
    $region19: #{transformer_forward.69} parent=1 // pred_check_branch
      %103 = sbr.rel (0) target = $region21
    $region20: #{transformer_forward.69} parent=1 // pred_region
      %104 = dma.done [#allocation3], 256
    $region21: #{transformer_forward.69} parent=1 // pred_fallthru
      _
    %105 = vsyncpa [#allocation3], 1

// kernel: transformer_forward.52
$region0: #{transformer_forward.52}
  #allocation0 [shape = 'u32[]', space=smem, size = 0x4, offset = 0x4, fixed_abs, tag = 'smem constant byte address 0x4 - core index']
  #allocation1 [shape = 'u32[144,128]{1,0:T(1,128)}', space=vmem, size = 0x12000, scoped, tag = 'internal scratch']
  %s0 = inlined_call_operand.vmem [shape: f32[16,32], index: 0, kind: input, shape index: {}]
  %s1 = inlined_call_operand.vmem [shape: bf16[32,64], index: 1, kind: input, shape index: {}]
  %s2 = inlined_call_operand.vmem [shape: f32[1,64], index: 2, kind: input, shape index: {}]
  %s3 = inlined_call_operand.vmem [shape: f32[16,64], index: 3, kind: output, shape index: {}]
  %s4 = sld [smem:[#allocation0]]
  $region22: #{transformer_forward.52} parent=0
    _
  %s6 = ssub.s32 1, %s4
  %s7 = scalar_select 0, %s6, %s4
  // Predicated region
  $region2: #{transformer_forward.52} parent=0 // pred_check
    _
  $region3: #{transformer_forward.52} parent=0 // pred_check_branch
    %9 = sbr.rel (0) target = $region5
  $region4: #{transformer_forward.52} parent=0 // pred_region
    _
  $region5: #{transformer_forward.52} parent=0 // pred_fallthru
    _
  // Predicated region
  $region6: #{transformer_forward.52} parent=0 // pred_check
    _
  $region7: #{transformer_forward.52} parent=0 // pred_check_branch
    %11 = sbr.rel (0) target = $region9
  $region8: #{transformer_forward.52} parent=0 // pred_region
    _
  $region9: #{transformer_forward.52} parent=0 // pred_fallthru
    _
  // Predicated region
  $region10: #{transformer_forward.52} parent=0 // pred_check
    _
  $region11: #{transformer_forward.52} parent=0 // pred_check_branch
    %13 = sbr.rel (0) target = $region13
  $region12: #{transformer_forward.52} parent=0 // pred_region
    _
  $region13: #{transformer_forward.52} parent=0 // pred_fallthru
    _
  %v15 = vld [vmem:[%s0] sm:$0xff]
  %v16 = vld [vmem:[%s0 + $0x8] sm:$0xff]
  %v17 = vpack.c.bf16 %v16, %v15
  %v18 = vld [vmem:[%s1] sm:$0xf]
  %v19 = vld [vmem:[%s1 + $0x4] sm:$0xf]
  %v20 = vld [vmem:[%s1 + $0x8] sm:$0xf]
  %v21 = vld [vmem:[%s1 + $0xc] sm:$0xf]
  %v22 = vld [vmem:[%s2] sm:$0x1]
  %v24 = vlaneseq
  %v25 = vshrl.u32 %v24, 7
  %v26 = vsub.s32 0, %v25
  %v27 = vrot.slane %v22, %v26
  %v33 = vunpack.c.l.b16 %v18
  %v34 = vunpack.c.l.b16 %v19
  %v35 = vunpack.c.l.b16 %v20
  %v36 = vunpack.c.l.b16 %v21
  %v37 = vpack.c.b16 %v34, %v33
  %v38 = vpack.c.b16 %v36, %v35
  %vm41 = vcmask 261120
  %v43 = vsel %vm41, %v17, 0
  %45 = vmatprep.subr.bf16.mxu0 0
  %46 = vmatpush1.bf16.msra.mxu0 0
  %47 = vmatprep.subr.bf16.mxu0 0
  %48 = vmatpush1.bf16.msra.mxu0 0
  %49 = vmatprep.subr.bf16.mxu0 0
  %50 = vmatpush1.bf16.msra.mxu0 0
  %51 = vmatprep.subr.bf16.mxu0 0
  %52 = vmatpush1.bf16.msra.mxu0 0
  %53 = vmatprep.subr.bf16.mxu0 0
  %54 = vmatpush1.bf16.msra.mxu0 0
  %55 = vmatprep.subr.bf16.mxu0 0
  %56 = vmatpush1.bf16.msra.mxu0 0
  %57 = vmatprep.subr.bf16.mxu0 0
  %58 = vmatpush1.bf16.msra.mxu0 %v38
  %59 = vmatprep.subr.bf16.mxu0 0
  %60 = vmatpush1.bf16.msra.mxu0 %v37
  %61 = vmatprep.subr.bf16.mxu0 0
  %62 = vmatpush2.bf16.msra.mxu0 0
  %63 = vmatprep.subr.bf16.mxu0 0
  %64 = vmatpush2.bf16.msra.mxu0 0
  %65 = vmatprep.subr.bf16.mxu0 0
  %66 = vmatpush2.bf16.msra.mxu0 0
  %67 = vmatprep.subr.bf16.mxu0 0
  %68 = vmatpush2.bf16.msra.mxu0 0
  %69 = vmatprep.subr.bf16.mxu0 0
  %70 = vmatpush2.bf16.msra.mxu0 0
  %71 = vmatprep.subr.bf16.mxu0 0
  %72 = vmatpush2.bf16.msra.mxu0 0
  %73 = vmatprep.subr.bf16.mxu0 0
  %74 = vmatpush2.bf16.msra.mxu0 0
  %75 = vmatprep.subr.bf16.mxu0 0
  %76 = vmatpush2.bf16.msra.mxu0 0
  %77 = vmatprep.mubr.bf16.mxu0 0
  %78 = vmatmul.mubr.bf16.gmra.mxu0 %v43
  %v79 = vpop.f32.mrf.mxu0
  %v80 = vadd.f32 %v27, %v79
  %v81 = vpop.f32.mrf.mxu0
  %v82 = vpop.f32.mrf.mxu0
  %v83 = vadd.f32 %v27, %v82
  %v84 = vpop.f32.mrf.mxu0
  %85 = vdwg.mxu0
  %vm86 = vcmask 523264
  %87 = vst.msk [vmem:[%s3] sm:$0xff] %vm86, %v80
  %88 = vst.msk [vmem:[%s3 + $0x8] sm:$0xff] %vm86, %v83
  // Predicated region
  $region14: #{transformer_forward.52} parent=0 // pred_check
    _
  $region15: #{transformer_forward.52} parent=0 // pred_check_branch
    %90 = sbr.rel (0) target = $region17
  $region16: #{transformer_forward.52} parent=0 // pred_region
    _
  $region17: #{transformer_forward.52} parent=0 // pred_fallthru
    _
  // Predicated region
  $region18: #{transformer_forward.52} parent=0 // pred_check
    _
  $region19: #{transformer_forward.52} parent=0 // pred_check_branch
    %92 = sbr.rel (0) target = $region21
  $region20: #{transformer_forward.52} parent=0 // pred_region
    _
  $region21: #{transformer_forward.52} parent=0 // pred_fallthru
    _

</llo_original>
